<compile_context>
chip_gen: v5e
topology: v5e:2x2
jax: 0.10.0
libtpu: 0.0.40
codegen_flags: <defaults>
</compile_context>

<pallas_src>
import jax
import jax.numpy as jnp
from jax.experimental import pallas as pl
from jax.experimental.pallas import tpu as pltpu


FEAT = 512        # CLIP image-feature width
N_CLASSES = 90    # classifier output width
N_PAD = 128       # lane-dense padded class dimension
B_TILE_CAP = 512  # VMEM-derived cap on the batch tile


def _round_up(x, m):
    return ((x + m - 1) // m) * m


def _device_kind():
    try:
        return jax.devices()[0].device_kind.lower()
    except Exception:  # pragma: no cover - defensive only
        return ""


_IS_V7 = "7" in _device_kind()   # dual-TC, ~3.2 TB/s HBM, 64 MiB VMEM


def _default_tk(D):
    """Reduction tile: big enough to amortize per-step overhead, mult of 128."""
    target = 4096 if _IS_V7 else 2048
    return min(target, _round_up(D, 128))


def _derive_batch_tiling(B):
    """Whole batch in one tile on single-TC chips; two tiles (one per TC) on
    v7x when the batch is large enough; multiple tiles only past the VMEM cap."""
    B_pad = _round_up(max(B, 8), 8)            # f32 sublane granularity
    if _IS_V7 and B_pad >= 256:
        half = _round_up((B_pad + 1) // 2, 8)  # one batch tile per TensorCore
        B_TILE = min(half, B_TILE_CAP)
    else:
        B_TILE = min(B_pad, B_TILE_CAP)
    B_pad = _round_up(B_pad, B_TILE)
    return B_TILE, B_pad


# ---------------------------------------------------------------------------
# Kernel
# ---------------------------------------------------------------------------
def clip_classifier_kernel(x_ref, wimg_ref, wcls_ref, b_ref, out_ref, acc_ref):
    # grid = (batch tiles, K tiles); K (reduction over D = C*H*W) is last.
    k = pl.program_id(1)

    @pl.when(k == 0)
    def _init():
        acc_ref[...] = jnp.zeros_like(acc_ref)

    # "encode_image" stand-in: accumulate [B_t, tk] @ [tk, 512] in f32 on MXU.
    # x arrives f32 from HBM and is cast to bf16 in-kernel (no extra HBM pass).
    x_bf16 = x_ref[...].astype(jnp.bfloat16)
    acc_ref[...] += jnp.dot(
        x_bf16, wimg_ref[...], preferred_element_type=jnp.float32
    )

    @pl.when(k == pl.num_programs(1) - 1)
    def _finalize():
        feats = acc_ref[...]                      # == features.float()
        logits = jnp.dot(                         # fp32 nn.Linear(512, 90->128)
            feats, wcls_ref[...], preferred_element_type=jnp.float32
        )
        out_ref[...] = logits + b_ref[...]


# ---------------------------------------------------------------------------
# One-time weight preparation (NOT in the per-call hot path)
# ---------------------------------------------------------------------------
def prepare_clip_classifier_params(w_img, w_cls, b_cls, *, tk=None):
    """Pre-cast / pre-pad the frozen weights once.

    w_img: [D, 512] synthetic-encoder projection; w_cls: [90, 512]; b_cls: [90].
    """
    D = w_img.shape[0]
    if tk is None:
        tk = _default_tk(D)
    D_pad = _round_up(D, tk)

    w_img_p = w_img.astype(jnp.bfloat16)               # bf16 stream, f32 accum
    if D_pad != D:
        w_img_p = jnp.pad(w_img_p, ((0, D_pad - D), (0, 0)))
    w_cls_t = jnp.pad(
        jnp.transpose(w_cls).astype(jnp.float32),      # [512, 90]
        ((0, 0), (0, N_PAD - N_CLASSES)),              # -> [512, 128]
    )
    b_row = jnp.pad(
        b_cls.astype(jnp.float32), (0, N_PAD - N_CLASSES)
    ).reshape(1, N_PAD)

    return {
        "w_img": w_img_p, "w_cls_t": w_cls_t, "b_row": b_row,
        "tk": int(tk), "d": int(D), "d_pad": int(D_pad),
    }


# ---------------------------------------------------------------------------
# Hot-path wrapper
# ---------------------------------------------------------------------------
def custom_clip_classifier(images, params):
    """images: [B, C, H, W] f32; params from prepare_clip_classifier_params.
    Returns logits [B, 90] f32."""
    B = images.shape[0]
    D, D_pad, TK = params["d"], params["d_pad"], params["tk"]
    w_img_p, w_cls_t, b_row = params["w_img"], params["w_cls_t"], params["b_row"]

    B_TILE, B_pad = _derive_batch_tiling(B)

    x = images.reshape(B, -1)                          # [B, D] f32
    if (B_pad - B) or (D_pad - D):
        x = jnp.pad(x, ((0, B_pad - B), (0, D_pad - D)))

    n_b_tiles = B_pad // B_TILE
    n_k_tiles = D_pad // TK
    grid = (n_b_tiles, n_k_tiles)

    # Explicit VMEM budget so large overhead-amortizing tiles compile on v5e.
    vmem_need = (
        2 * B_TILE * TK * 4          # x tiles (f32, double-buffered)
        + 2 * TK * FEAT * 2          # w_img tiles (bf16, double-buffered)
        + 2 * FEAT * N_PAD * 4       # w_cls^T
        + 2 * 8 * N_PAD * 4          # bias (padded)
        + 2 * B_TILE * N_PAD * 4     # output tiles
        + B_TILE * FEAT * 4          # accumulator scratch
    )
    vmem_limit = min(max(vmem_need + (8 << 20), 32 << 20), 48 << 20)

    cost = pl.CostEstimate(
        flops=2 * B_pad * D_pad * FEAT + 2 * B_pad * FEAT * N_PAD,
        transcendentals=0,
        bytes_accessed=(
            x.size * 4                                  # x read once (f32)
            + n_b_tiles * w_img_p.size * 2              # w_img per batch tile
            + n_b_tiles * w_cls_t.size * 4
            + n_b_tiles * b_row.size * 4
            + B_pad * N_PAD * 4                         # output
        ),
    )

    out_padded = pl.pallas_call(
        clip_classifier_kernel,
        out_shape=jax.ShapeDtypeStruct((B_pad, N_PAD), jnp.float32),
        grid_spec=pltpu.PrefetchScalarGridSpec(
            num_scalar_prefetch=0,
            grid=grid,
            in_specs=[
                pl.BlockSpec((B_TILE, TK), lambda i, k: (i, k)),      # x (f32)
                pl.BlockSpec((TK, FEAT), lambda i, k: (k, 0)),        # w_img (bf16)
                pl.BlockSpec((FEAT, N_PAD), lambda i, k: (0, 0)),     # w_cls^T (f32)
                pl.BlockSpec((1, N_PAD), lambda i, k: (0, 0)),        # bias
            ],
            out_specs=pl.BlockSpec((B_TILE, N_PAD), lambda i, k: (i, 0)),
            scratch_shapes=[pltpu.VMEM((B_TILE, FEAT), jnp.float32)],
        ),
        compiler_params=pltpu.CompilerParams(
            dimension_semantics=("parallel", "arbitrary"),
            vmem_limit_bytes=int(vmem_limit),
        ),
        cost_estimate=cost,
    )(x, w_img_p, w_cls_t, b_row)

    return out_padded[:B, :N_CLASSES]


if __name__ == "__main__":
    key = jax.random.PRNGKey(0)
    k_img, k_wimg, k_wcls, k_b = jax.random.split(key, 4)

    B, C, H, W = 2, 4, 16, 16           # small synthetic image batch (NCHW)
    D = C * H * W                        # 1024
    # NOTE: perf tuning (TK, B_TILE) should be validated at real CLIP sizes
    # (D = 150528, B >= 64); this harness only checks correctness.

    images = jax.random.normal(k_img, (B, C, H, W), dtype=jnp.float32)
    # deterministic synthetic "CLIP encoder" projection + classifier params
    w_img = jax.random.normal(k_wimg, (D, FEAT), dtype=jnp.float32) * 0.02
    w_cls = jax.random.normal(k_wcls, (N_CLASSES, FEAT), dtype=jnp.float32) * 0.02
    b_cls = jax.random.normal(k_b, (N_CLASSES,), dtype=jnp.float32) * 0.01

    params = prepare_clip_classifier_params(w_img, w_cls, b_cls)   # one-time
    out = custom_clip_classifier(images, params)
    jax.block_until_ready(out)
    assert out.shape == (B, N_CLASSES)

    # Reference in plain JAX with the same bf16 casting of the encoder stream
    # (kernel casts x/w_img to bf16 and accumulates the products in f32 on MXU).
    x_bf = images.reshape(B, D).astype(jnp.bfloat16).astype(jnp.float32)
    wi_bf = w_img.astype(jnp.bfloat16).astype(jnp.float32)
    feats_ref = jnp.dot(x_bf, wi_bf, precision=jax.lax.Precision.HIGHEST)
    ref = (
        jnp.dot(feats_ref, w_cls.T, precision=jax.lax.Precision.HIGHEST) + b_cls
    )
    assert jnp.allclose(out, ref, atol=1e-2, rtol=1e-2)

    print("KERNEL_OK")
</pallas_src>

<mosaic_0001>
module attributes {stable_mosaic.version = 11 : i64} {
  func.func @clip_classifier_kernel(%arg0: i32, %arg1: i32, %arg2: memref<8x1024xf32, #tpu.memory_space<vmem>>, %arg3: memref<1024x512xbf16, #tpu.memory_space<vmem>>, %arg4: memref<512x128xf32, #tpu.memory_space<vmem>>, %arg5: memref<1x128xf32, #tpu.memory_space<vmem>>, %arg6: memref<8x128xf32, #tpu.memory_space<vmem>>, %arg7: memref<8x512xf32, #tpu.memory_space<vmem>>) attributes {dimension_semantics = [#tpu.dimension_semantics<parallel>, #tpu.dimension_semantics<arbitrary>], iteration_bounds = array<i64: 1, 1>, scalar_prefetch = 0 : i64, scratch_operands = 1 : i64, tpu.core_type = #tpu.core_type<tc>, window_params = [{transform_indices = @transform_0, window_bounds = array<i64: 8, 1024>}, {transform_indices = @transform_1, window_bounds = array<i64: 1024, 512>}, {pipeline_mode = #tpu.pipeline_mode<synchronous>, transform_indices = @transform_2, window_bounds = array<i64: 512, 128>}, {pipeline_mode = #tpu.pipeline_mode<synchronous>, transform_indices = @transform_3, window_bounds = array<i64: 1, 128>}, {transform_indices = @transform_4, window_bounds = array<i64: 8, 128>}]} {
    %c0_i32 = arith.constant 0 : i32
    %0 = arith.cmpi eq, %arg1, %c0_i32 : i32
    %1 = arith.extui %0 : i1 to i32
    %c0_i32_0 = arith.constant 0 : i32
    %2 = arith.cmpi ne, %1, %c0_i32_0 : i32
    scf.if %2 {
      %cst_10 = arith.constant 0.000000e+00 : f32
      %13 = vector.broadcast %cst_10 : f32 to vector<8x512xf32>
      %c0_11 = arith.constant 0 : index
      %c0_12 = arith.constant 0 : index
      %14 = vector.load %arg7[%c0_11, %c0_12] : memref<8x512xf32, #tpu.memory_space<vmem>>, vector<8x512xf32>
      tpu.vector_store %arg7[%c0_11, %c0_12], %13 {strides = array<i32>} : memref<8x512xf32, #tpu.memory_space<vmem>>, vector<8x512xf32>,
    } else {
    }
    %c0 = arith.constant 0 : index
    %c0_1 = arith.constant 0 : index
    %3 = vector.load %arg2[%c0, %c0_1] : memref<8x1024xf32, #tpu.memory_space<vmem>>, vector<8x1024xf32>
    %4 = arith.truncf %3 : vector<8x1024xf32> to vector<8x1024xbf16>
    %c0_2 = arith.constant 0 : index
    %c0_3 = arith.constant 0 : index
    %5 = vector.load %arg7[%c0_2, %c0_3] : memref<8x512xf32, #tpu.memory_space<vmem>>, vector<8x512xf32>
    %c0_4 = arith.constant 0 : index
    %c0_5 = arith.constant 0 : index
    %6 = vector.load %arg3[%c0_4, %c0_5] : memref<1024x512xbf16, #tpu.memory_space<vmem>>, vector<1024x512xbf16>
    %cst = arith.constant dense<0.000000e+00> : vector<8x512xf32>
    %7 = tpu.matmul %4, %6, %cst {dimension_numbers = #tpu.dot_dimension_numbers<[1], [0], [0], [1], [0, 0, 1, 1], [], []>} : vector<8x1024xbf16>, vector<1024x512xbf16>, vector<8x512xf32> -> vector<8x512xf32>
    %8 = arith.addf %5, %7 : vector<8x512xf32>
    %c0_6 = arith.constant 0 : index
    %c0_7 = arith.constant 0 : index
    %9 = vector.load %arg7[%c0_6, %c0_7] : memref<8x512xf32, #tpu.memory_space<vmem>>, vector<8x512xf32>
    tpu.vector_store %arg7[%c0_6, %c0_7], %8 {strides = array<i32>} : memref<8x512xf32, #tpu.memory_space<vmem>>, vector<8x512xf32>,
    %c0_i32_8 = arith.constant 0 : i32
    %10 = arith.cmpi eq, %arg1, %c0_i32_8 : i32
    %11 = arith.extui %10 : i1 to i32
    %c0_i32_9 = arith.constant 0 : i32
    %12 = arith.cmpi ne, %11, %c0_i32_9 : i32
    scf.if %12 {
      %c0_10 = arith.constant 0 : index
      %c0_11 = arith.constant 0 : index
      %13 = vector.load %arg7[%c0_10, %c0_11] : memref<8x512xf32, #tpu.memory_space<vmem>>, vector<8x512xf32>
      %c0_12 = arith.constant 0 : index
      %c0_13 = arith.constant 0 : index
      %14 = vector.load %arg4[%c0_12, %c0_13] : memref<512x128xf32, #tpu.memory_space<vmem>>, vector<512x128xf32>
      %cst_14 = arith.constant dense<0.000000e+00> : vector<8x128xf32>
      %15 = tpu.matmul %13, %14, %cst_14 {dimension_numbers = #tpu.dot_dimension_numbers<[1], [0], [0], [1], [0, 0, 1, 1], [], []>} : vector<8x512xf32>, vector<512x128xf32>, vector<8x128xf32> -> vector<8x128xf32>
      %c0_15 = arith.constant 0 : index
      %c0_16 = arith.constant 0 : index
      %16 = vector.load %arg5[%c0_15, %c0_16] : memref<1x128xf32, #tpu.memory_space<vmem>>, vector<1x128xf32>
      %17 = vector.broadcast %16 : vector<1x128xf32> to vector<8x128xf32>
      %18 = arith.addf %15, %17 : vector<8x128xf32>
      %c0_17 = arith.constant 0 : index
      %c0_18 = arith.constant 0 : index
      %19 = vector.load %arg6[%c0_17, %c0_18] : memref<8x128xf32, #tpu.memory_space<vmem>>, vector<8x128xf32>
      tpu.vector_store %arg6[%c0_17, %c0_18], %18 {strides = array<i32>} : memref<8x128xf32, #tpu.memory_space<vmem>>, vector<8x128xf32>,
    } else {
    }
    return
  }
  func.func @transform_0(%arg0: i32, %arg1: i32) -> (i32, i32) {
    %c0_i32 = arith.constant 0 : i32
    return %arg0, %arg1 : i32, i32
  }
  func.func @transform_1(%arg0: i32, %arg1: i32) -> (i32, i32) {
    %c0_i32 = arith.constant 0 : i32
    %c0_i32_0 = arith.constant 0 : i32
    return %arg1, %c0_i32 : i32, i32
  }
  func.func @transform_2(%arg0: i32, %arg1: i32) -> (i32, i32) {
    %c0_i32 = arith.constant 0 : i32
    %c0_i32_0 = arith.constant 0 : i32
    %c0_i32_1 = arith.constant 0 : i32
    return %c0_i32, %c0_i32_0 : i32, i32
  }
  func.func @transform_3(%arg0: i32, %arg1: i32) -> (i32, i32) {
    %c0_i32 = arith.constant 0 : i32
    %c0_i32_0 = arith.constant 0 : i32
    %c0_i32_1 = arith.constant 0 : i32
    return %c0_i32, %c0_i32_0 : i32, i32
  }
  func.func @transform_4(%arg0: i32, %arg1: i32) -> (i32, i32) {
    %c0_i32 = arith.constant 0 : i32
    %c0_i32_0 = arith.constant 0 : i32
    return %arg0, %c0_i32 : i32, i32
  }
}

</mosaic_0001>

<llo_original>
// kernel: tpu_custom_call.1
$region0: #{tpu_custom_call.1}
  #allocation0 [shape = 'u32[]', space=smem, size = 0x4, offset = 0x4, fixed_abs, tag = 'smem constant byte address 0x4 - core index']
  #allocation1 [shape = 'u32[72,128]{1,0:T(1,128)}', space=vmem, size = 0x9000, scoped, tag = 'internal scratch']
  #allocation2 [shape = 'f32[8,512]{1,0:T(8,128)}', space=vmem, size = 0x4000, scoped, tag = 'scratch operand']
  %s0 = inlined_call_operand.hbm [shape: f32[8,1024], index: 0, kind: input, shape index: {}]
  %s1 = inlined_call_operand.hbm [shape: bf16[1024,512], index: 1, kind: input, shape index: {}]
  %s2 = inlined_call_operand.hbm [shape: f32[512,128], index: 2, kind: input, shape index: {}]
  %s3 = inlined_call_operand.vmem [shape: f32[1,128], index: 3, kind: input, shape index: {}]
  %s4 = inlined_call_operand.hbm [shape: f32[8,128], index: 4, kind: output, shape index: {}]
  %s5 = sld [smem:[#allocation0]]
  $region46: #{tpu_custom_call.1} parent=0
    _
  %s7 = ssub.s32 1, %s5
  %s8 = scalar_select 0, %s7, %s5
  $region1: #{tpu_custom_call.1} parent=0
    #allocation3 [shape = 'u8[32768]{0}', space=vmem, size = 0x8000, scoped, tag = 'input window, operand 0, single buffered']
    #allocation4 [shape = 's32[1]{0}', space=sflag, size = 0x4, scoped, tag = 'scoped memory for tpu_custom_call.1']
    #allocation5 [shape = 's32[1]{0}', space=sflag, size = 0x4, scoped, tag = 'scoped memory for tpu_custom_call.1']
    #allocation6 [shape = 'u8[1048576]{0}', space=vmem, size = 0x100000, scoped, tag = 'input window, operand 1, single buffered']
    #allocation7 [shape = 's32[1]{0}', space=sflag, size = 0x4, scoped, tag = 'scoped memory for tpu_custom_call.1']
    #allocation8 [shape = 'u8[262144]{0}', space=vmem, size = 0x40000, scoped, tag = 'input window, operand 2, single buffered']
    #allocation9 [shape = 'u8[4096]{0}', space=vmem, size = 0x1000, scoped, tag = 'output window, operand 0, single buffered']
    %9 = vsyncpa [#allocation4], 0
    %10 = vsyncpa [#allocation7], 0
    %11 = vsyncpa [#allocation5], 0
    // Predicated region
    $region2: #{tpu_custom_call.1} parent=1 // pred_check
      _
    $region3: #{tpu_custom_call.1} parent=1 // pred_check_branch
      %13 = sbr.rel (0) target = $region5
    $region4: #{tpu_custom_call.1} parent=1 // pred_region
      %15 = vsyncadd [#allocation4], 0
      %s17 = sshll.u32 %s0, 4
      %s18 = int_to_ptr.hbm [resolvable:$true] %s17
      %s19 = sshll.u32 [#allocation3], 4
      %s20 = int_to_ptr.vmem [resolvable:$true] %s19
      %22 = dma.hbm_to_vmem [thread:$0]  %s18, 1024, %s20, [#allocation4]
    $region5: #{tpu_custom_call.1} parent=1 // pred_fallthru
      _
    // Predicated region
    $region6: #{tpu_custom_call.1} parent=1 // pred_check
      _
    $region7: #{tpu_custom_call.1} parent=1 // pred_check_branch
      %24 = sbr.rel (0) target = $region9
    $region8: #{tpu_custom_call.1} parent=1 // pred_region
      %26 = vsyncadd [#allocation7], 0
      %s27 = sshll.u32 %s1, 4
      %s28 = int_to_ptr.hbm [resolvable:$true] %s27
      %s29 = sshll.u32 [#allocation6], 4
      %s30 = int_to_ptr.vmem [resolvable:$true] %s29
      %35 = dma.hbm_to_vmem [thread:$0]  %s28, 32768, %s30, [#allocation7], 256, 256, 16
    $region9: #{tpu_custom_call.1} parent=1 // pred_fallthru
      _
    // Predicated region
    $region10: #{tpu_custom_call.1} parent=1 // pred_check
      _
    $region11: #{tpu_custom_call.1} parent=1 // pred_check_branch
      %37 = sbr.rel (0) target = $region13
    $region12: #{tpu_custom_call.1} parent=1 // pred_region
      %39 = vsyncadd [#allocation7], 0
      %s40 = sshll.u32 %s2, 4
      %s41 = int_to_ptr.hbm [resolvable:$true] %s40
      %s42 = sshll.u32 [#allocation8], 4
      %s43 = int_to_ptr.vmem [resolvable:$true] %s42
      %48 = dma.hbm_to_vmem [thread:$0]  %s41, 8192, %s43, [#allocation7], 128, 128, 8
    $region13: #{tpu_custom_call.1} parent=1 // pred_fallthru
      _
    // Predicated region
    $region14: #{tpu_custom_call.1} parent=1 // pred_check
      _
    $region15: #{tpu_custom_call.1} parent=1 // pred_check_branch
      %50 = sbr.rel (0) target = $region17
    $region16: #{tpu_custom_call.1} parent=1 // pred_region
      _
    $region17: #{tpu_custom_call.1} parent=1 // pred_fallthru
      _
    // Predicated region
    $region18: #{tpu_custom_call.1} parent=1 // pred_check
      _
    $region19: #{tpu_custom_call.1} parent=1 // pred_check_branch
      %52 = sbr.rel (0) target = $region21
    $region20: #{tpu_custom_call.1} parent=1 // pred_region
      %54 = dma.done [#allocation4], 1024
    $region21: #{tpu_custom_call.1} parent=1 // pred_fallthru
      _
    // Predicated region
    $region22: #{tpu_custom_call.1} parent=1 // pred_check
      _
    $region23: #{tpu_custom_call.1} parent=1 // pred_check_branch
      %56 = sbr.rel (0) target = $region25
    $region24: #{tpu_custom_call.1} parent=1 // pred_region
      %58 = dma.done [#allocation7], 32768
    $region25: #{tpu_custom_call.1} parent=1 // pred_fallthru
      _
    // Predicated region
    $region26: #{tpu_custom_call.1} parent=1 // pred_check
      _
    $region27: #{tpu_custom_call.1} parent=1 // pred_check_branch
      %60 = sbr.rel (0) target = $region29
    $region28: #{tpu_custom_call.1} parent=1 // pred_region
      %62 = dma.done [#allocation7], 8192
    $region29: #{tpu_custom_call.1} parent=1 // pred_fallthru
      _
    %p63 = scmp.eq.s32.totalorder 0, 0
    // Predicated region
    $region30: #{tpu_custom_call.1} parent=1 // pred_check
      %p64 = pneg %p63
    $region31: #{tpu_custom_call.1} parent=1 // pred_check_branch
      %66 = sbr.rel (%p64) target = $region33
    $region32: #{tpu_custom_call.1} parent=1 // pred_region
      %67 = vst [vmem:[#allocation2] sm:$0xff] 0.0
      %68 = vst [vmem:[#allocation2 + $0x8] sm:$0xff] 0.0
      %69 = vst [vmem:[#allocation2 + $0x10] sm:$0xff] 0.0
      %70 = vst [vmem:[#allocation2 + $0x18] sm:$0xff] 0.0
    $region33: #{tpu_custom_call.1} parent=1 // pred_fallthru
      _
    %v71 = vld [vmem:[#allocation3] sm:$0xff]
    %v72 = vld [vmem:[#allocation3 + $0x8] sm:$0xff]
    %v73 = vld [vmem:[#allocation3 + $0x10] sm:$0xff]
    %v74 = vld [vmem:[#allocation3 + $0x18] sm:$0xff]
    %v75 = vld [vmem:[#allocation3 + $0x20] sm:$0xff]
    %v76 = vld [vmem:[#allocation3 + $0x28] sm:$0xff]
    %v77 = vld [vmem:[#allocation3 + $0x30] sm:$0xff]
    %v78 = vld [vmem:[#allocation3 + $0x38] sm:$0xff]
    %v79 = vpack.c.bf16 %v71, %v71
    %v80 = vpack.c.bf16 %v72, %v72
    %v81 = vpack.c.bf16 %v73, %v73
    %v82 = vpack.c.bf16 %v74, %v74
    %v83 = vpack.c.bf16 %v75, %v75
    %v84 = vpack.c.bf16 %v76, %v76
    %v85 = vpack.c.bf16 %v77, %v77
    %v86 = vpack.c.bf16 %v78, %v78
    %v87 = vld [vmem:[#allocation2] sm:$0xff]
    %v88 = vld [vmem:[#allocation2 + $0x8] sm:$0xff]
    %v89 = vld [vmem:[#allocation2 + $0x10] sm:$0xff]
    %v90 = vld [vmem:[#allocation2 + $0x18] sm:$0xff]
    %v91 = vld [vmem:[#allocation6] sm:$0xff]
    %v92 = vld [vmem:[#allocation6 + $0x8] sm:$0xff]
    %v93 = vld [vmem:[#allocation6 + $0x10] sm:$0xff]
    %v94 = vld [vmem:[#allocation6 + $0x18] sm:$0xff]
    %v95 = vld [vmem:[#allocation6 + $0x20] sm:$0xff]
    %v96 = vld [vmem:[#allocation6 + $0x28] sm:$0xff]
    %v97 = vld [vmem:[#allocation6 + $0x30] sm:$0xff]
    %v98 = vld [vmem:[#allocation6 + $0x38] sm:$0xff]
    %v99 = vld [vmem:[#allocation6 + $0x40] sm:$0xff]
    %v100 = vld [vmem:[#allocation6 + $0x48] sm:$0xff]
    %v101 = vld [vmem:[#allocation6 + $0x50] sm:$0xff]
    %v102 = vld [vmem:[#allocation6 + $0x58] sm:$0xff]
    %v103 = vld [vmem:[#allocation6 + $0x60] sm:$0xff]
    %v104 = vld [vmem:[#allocation6 + $0x68] sm:$0xff]
    %v105 = vld [vmem:[#allocation6 + $0x70] sm:$0xff]
    %v106 = vld [vmem:[#allocation6 + $0x78] sm:$0xff]
    %v107 = vld [vmem:[#allocation6 + $0x80] sm:$0xff]
    %v108 = vld [vmem:[#allocation6 + $0x88] sm:$0xff]
    %v109 = vld [vmem:[#allocation6 + $0x90] sm:$0xff]
    %v110 = vld [vmem:[#allocation6 + $0x98] sm:$0xff]
    %v111 = vld [vmem:[#allocation6 + $0xa0] sm:$0xff]
    %v112 = vld [vmem:[#allocation6 + $0xa8] sm:$0xff]
    %v113 = vld [vmem:[#allocation6 + $0xb0] sm:$0xff]
    %v114 = vld [vmem:[#allocation6 + $0xb8] sm:$0xff]
    %v115 = vld [vmem:[#allocation6 + $0xc0] sm:$0xff]
    %v116 = vld [vmem:[#allocation6 + $0xc8] sm:$0xff]
    %v117 = vld [vmem:[#allocation6 + $0xd0] sm:$0xff]
    %v118 = vld [vmem:[#allocation6 + $0xd8] sm:$0xff]
    %v119 = vld [vmem:[#allocation6 + $0xe0] sm:$0xff]
    %v120 = vld [vmem:[#allocation6 + $0xe8] sm:$0xff]
    %v121 = vld [vmem:[#allocation6 + $0xf0] sm:$0xff]
    %v122 = vld [vmem:[#allocation6 + $0xf8] sm:$0xff]
    %v123 = vld [vmem:[#allocation6 + $0x100] sm:$0xff]
    %v124 = vld [vmem:[#allocation6 + $0x108] sm:$0xff]
    %v125 = vld [vmem:[#allocation6 + $0x110] sm:$0xff]
    %v126 = vld [vmem:[#allocation6 + $0x118] sm:$0xff]
    %v127 = vld [vmem:[#allocation6 + $0x120] sm:$0xff]
    %v128 = vld [vmem:[#allocation6 + $0x128] sm:$0xff]
    %v129 = vld [vmem:[#allocation6 + $0x130] sm:$0xff]
    %v130 = vld [vmem:[#allocation6 + $0x138] sm:$0xff]
    %v131 = vld [vmem:[#allocation6 + $0x140] sm:$0xff]
    %v132 = vld [vmem:[#allocation6 + $0x148] sm:$0xff]
    %v133 = vld [vmem:[#allocation6 + $0x150] sm:$0xff]
    %v134 = vld [vmem:[#allocation6 + $0x158] sm:$0xff]
    %v135 = vld [vmem:[#allocation6 + $0x160] sm:$0xff]
    %v136 = vld [vmem:[#allocation6 + $0x168] sm:$0xff]
    %v137 = vld [vmem:[#allocation6 + $0x170] sm:$0xff]
    %v138 = vld [vmem:[#allocation6 + $0x178] sm:$0xff]
    %v139 = vld [vmem:[#allocation6 + $0x180] sm:$0xff]
    %v140 = vld [vmem:[#allocation6 + $0x188] sm:$0xff]
    %v141 = vld [vmem:[#allocation6 + $0x190] sm:$0xff]
    %v142 = vld [vmem:[#allocation6 + $0x198] sm:$0xff]
    %v143 = vld [vmem:[#allocation6 + $0x1a0] sm:$0xff]
    %v144 = vld [vmem:[#allocation6 + $0x1a8] sm:$0xff]
    %v145 = vld [vmem:[#allocation6 + $0x1b0] sm:$0xff]
    %v146 = vld [vmem:[#allocation6 + $0x1b8] sm:$0xff]
    %v147 = vld [vmem:[#allocation6 + $0x1c0] sm:$0xff]
    %v148 = vld [vmem:[#allocation6 + $0x1c8] sm:$0xff]
    %v149 = vld [vmem:[#allocation6 + $0x1d0] sm:$0xff]
    %v150 = vld [vmem:[#allocation6 + $0x1d8] sm:$0xff]
    %v151 = vld [vmem:[#allocation6 + $0x1e0] sm:$0xff]
    %v152 = vld [vmem:[#allocation6 + $0x1e8] sm:$0xff]
    %v153 = vld [vmem:[#allocation6 + $0x1f0] sm:$0xff]
    %v154 = vld [vmem:[#allocation6 + $0x1f8] sm:$0xff]
    %v155 = vld [vmem:[#allocation6 + $0x200] sm:$0xff]
    %v156 = vld [vmem:[#allocation6 + $0x208] sm:$0xff]
    %v157 = vld [vmem:[#allocation6 + $0x210] sm:$0xff]
    %v158 = vld [vmem:[#allocation6 + $0x218] sm:$0xff]
    %v159 = vld [vmem:[#allocation6 + $0x220] sm:$0xff]
    %v160 = vld [vmem:[#allocation6 + $0x228] sm:$0xff]
    %v161 = vld [vmem:[#allocation6 + $0x230] sm:$0xff]
    %v162 = vld [vmem:[#allocation6 + $0x238] sm:$0xff]
    %v163 = vld [vmem:[#allocation6 + $0x240] sm:$0xff]
    %v164 = vld [vmem:[#allocation6 + $0x248] sm:$0xff]
    %v165 = vld [vmem:[#allocation6 + $0x250] sm:$0xff]
    %v166 = vld [vmem:[#allocation6 + $0x258] sm:$0xff]
    %v167 = vld [vmem:[#allocation6 + $0x260] sm:$0xff]
    %v168 = vld [vmem:[#allocation6 + $0x268] sm:$0xff]
    %v169 = vld [vmem:[#allocation6 + $0x270] sm:$0xff]
    %v170 = vld [vmem:[#allocation6 + $0x278] sm:$0xff]
    %v171 = vld [vmem:[#allocation6 + $0x280] sm:$0xff]
    %v172 = vld [vmem:[#allocation6 + $0x288] sm:$0xff]
    %v173 = vld [vmem:[#allocation6 + $0x290] sm:$0xff]
    %v174 = vld [vmem:[#allocation6 + $0x298] sm:$0xff]
    %v175 = vld [vmem:[#allocation6 + $0x2a0] sm:$0xff]
    %v176 = vld [vmem:[#allocation6 + $0x2a8] sm:$0xff]
    %v177 = vld [vmem:[#allocation6 + $0x2b0] sm:$0xff]
    %v178 = vld [vmem:[#allocation6 + $0x2b8] sm:$0xff]
    %v179 = vld [vmem:[#allocation6 + $0x2c0] sm:$0xff]
    %v180 = vld [vmem:[#allocation6 + $0x2c8] sm:$0xff]
    %v181 = vld [vmem:[#allocation6 + $0x2d0] sm:$0xff]
    %v182 = vld [vmem:[#allocation6 + $0x2d8] sm:$0xff]
    %v183 = vld [vmem:[#allocation6 + $0x2e0] sm:$0xff]
    %v184 = vld [vmem:[#allocation6 + $0x2e8] sm:$0xff]
    %v185 = vld [vmem:[#allocation6 + $0x2f0] sm:$0xff]
    %v186 = vld [vmem:[#allocation6 + $0x2f8] sm:$0xff]
    %v187 = vld [vmem:[#allocation6 + $0x300] sm:$0xff]
    %v188 = vld [vmem:[#allocation6 + $0x308] sm:$0xff]
    %v189 = vld [vmem:[#allocation6 + $0x310] sm:$0xff]
    %v190 = vld [vmem:[#allocation6 + $0x318] sm:$0xff]
    %v191 = vld [vmem:[#allocation6 + $0x320] sm:$0xff]
    %v192 = vld [vmem:[#allocation6 + $0x328] sm:$0xff]
    %v193 = vld [vmem:[#allocation6 + $0x330] sm:$0xff]
    %v194 = vld [vmem:[#allocation6 + $0x338] sm:$0xff]
    %v195 = vld [vmem:[#allocation6 + $0x340] sm:$0xff]
    %v196 = vld [vmem:[#allocation6 + $0x348] sm:$0xff]
    %v197 = vld [vmem:[#allocation6 + $0x350] sm:$0xff]
    %v198 = vld [vmem:[#allocation6 + $0x358] sm:$0xff]
    %v199 = vld [vmem:[#allocation6 + $0x360] sm:$0xff]
    %v200 = vld [vmem:[#allocation6 + $0x368] sm:$0xff]
    %v201 = vld [vmem:[#allocation6 + $0x370] sm:$0xff]
    %v202 = vld [vmem:[#allocation6 + $0x378] sm:$0xff]
    %v203 = vld [vmem:[#allocation6 + $0x380] sm:$0xff]
    %v204 = vld [vmem:[#allocation6 + $0x388] sm:$0xff]
    %v205 = vld [vmem:[#allocation6 + $0x390] sm:$0xff]
    %v206 = vld [vmem:[#allocation6 + $0x398] sm:$0xff]
    %v207 = vld [vmem:[#allocation6 + $0x3a0] sm:$0xff]
    %v208 = vld [vmem:[#allocation6 + $0x3a8] sm:$0xff]
    %v209 = vld [vmem:[#allocation6 + $0x3b0] sm:$0xff]
    %v210 = vld [vmem:[#allocation6 + $0x3b8] sm:$0xff]
    %v211 = vld [vmem:[#allocation6 + $0x3c0] sm:$0xff]
    %v212 = vld [vmem:[#allocation6 + $0x3c8] sm:$0xff]
    %v213 = vld [vmem:[#allocation6 + $0x3d0] sm:$0xff]
    %v214 = vld [vmem:[#allocation6 + $0x3d8] sm:$0xff]
    %v215 = vld [vmem:[#allocation6 + $0x3e0] sm:$0xff]
    %v216 = vld [vmem:[#allocation6 + $0x3e8] sm:$0xff]
    %v217 = vld [vmem:[#allocation6 + $0x3f0] sm:$0xff]
    %v218 = vld [vmem:[#allocation6 + $0x3f8] sm:$0xff]
    %v219 = vld [vmem:[#allocation6 + $0x400] sm:$0xff]
    %v220 = vld [vmem:[#allocation6 + $0x408] sm:$0xff]
    %v221 = vld [vmem:[#allocation6 + $0x410] sm:$0xff]
    %v222 = vld [vmem:[#allocation6 + $0x418] sm:$0xff]
    %v223 = vld [vmem:[#allocation6 + $0x420] sm:$0xff]
    %v224 = vld [vmem:[#allocation6 + $0x428] sm:$0xff]
    %v225 = vld [vmem:[#allocation6 + $0x430] sm:$0xff]
    %v226 = vld [vmem:[#allocation6 + $0x438] sm:$0xff]
    %v227 = vld [vmem:[#allocation6 + $0x440] sm:$0xff]
    %v228 = vld [vmem:[#allocation6 + $0x448] sm:$0xff]
    %v229 = vld [vmem:[#allocation6 + $0x450] sm:$0xff]
    %v230 = vld [vmem:[#allocation6 + $0x458] sm:$0xff]
    %v231 = vld [vmem:[#allocation6 + $0x460] sm:$0xff]
    %v232 = vld [vmem:[#allocation6 + $0x468] sm:$0xff]
    %v233 = vld [vmem:[#allocation6 + $0x470] sm:$0xff]
    %v234 = vld [vmem:[#allocation6 + $0x478] sm:$0xff]
    %v235 = vld [vmem:[#allocation6 + $0x480] sm:$0xff]
    %v236 = vld [vmem:[#allocation6 + $0x488] sm:$0xff]
    %v237 = vld [vmem:[#allocation6 + $0x490] sm:$0xff]
    %v238 = vld [vmem:[#allocation6 + $0x498] sm:$0xff]
    %v239 = vld [vmem:[#allocation6 + $0x4a0] sm:$0xff]
    %v240 = vld [vmem:[#allocation6 + $0x4a8] sm:$0xff]
    %v241 = vld [vmem:[#allocation6 + $0x4b0] sm:$0xff]
    %v242 = vld [vmem:[#allocation6 + $0x4b8] sm:$0xff]
    %v243 = vld [vmem:[#allocation6 + $0x4c0] sm:$0xff]
    %v244 = vld [vmem:[#allocation6 + $0x4c8] sm:$0xff]
    %v245 = vld [vmem:[#allocation6 + $0x4d0] sm:$0xff]
    %v246 = vld [vmem:[#allocation6 + $0x4d8] sm:$0xff]
    %v247 = vld [vmem:[#allocation6 + $0x4e0] sm:$0xff]
    %v248 = vld [vmem:[#allocation6 + $0x4e8] sm:$0xff]
    %v249 = vld [vmem:[#allocation6 + $0x4f0] sm:$0xff]
    %v250 = vld [vmem:[#allocation6 + $0x4f8] sm:$0xff]
    %v251 = vld [vmem:[#allocation6 + $0x500] sm:$0xff]
    %v252 = vld [vmem:[#allocation6 + $0x508] sm:$0xff]
    %v253 = vld [vmem:[#allocation6 + $0x510] sm:$0xff]
    %v254 = vld [vmem:[#allocation6 + $0x518] sm:$0xff]
    %v255 = vld [vmem:[#allocation6 + $0x520] sm:$0xff]
    %v256 = vld [vmem:[#allocation6 + $0x528] sm:$0xff]
    %v257 = vld [vmem:[#allocation6 + $0x530] sm:$0xff]
    %v258 = vld [vmem:[#allocation6 + $0x538] sm:$0xff]
    %v259 = vld [vmem:[#allocation6 + $0x540] sm:$0xff]
    %v260 = vld [vmem:[#allocation6 + $0x548] sm:$0xff]
    %v261 = vld [vmem:[#allocation6 + $0x550] sm:$0xff]
    %v262 = vld [vmem:[#allocation6 + $0x558] sm:$0xff]
    %v263 = vld [vmem:[#allocation6 + $0x560] sm:$0xff]
    %v264 = vld [vmem:[#allocation6 + $0x568] sm:$0xff]
    %v265 = vld [vmem:[#allocation6 + $0x570] sm:$0xff]
    %v266 = vld [vmem:[#allocation6 + $0x578] sm:$0xff]
    %v267 = vld [vmem:[#allocation6 + $0x580] sm:$0xff]
    %v268 = vld [vmem:[#allocation6 + $0x588] sm:$0xff]
    %v269 = vld [vmem:[#allocation6 + $0x590] sm:$0xff]
    %v270 = vld [vmem:[#allocation6 + $0x598] sm:$0xff]
    %v271 = vld [vmem:[#allocation6 + $0x5a0] sm:$0xff]
    %v272 = vld [vmem:[#allocation6 + $0x5a8] sm:$0xff]
    %v273 = vld [vmem:[#allocation6 + $0x5b0] sm:$0xff]
    %v274 = vld [vmem:[#allocation6 + $0x5b8] sm:$0xff]
    %v275 = vld [vmem:[#allocation6 + $0x5c0] sm:$0xff]
    %v276 = vld [vmem:[#allocation6 + $0x5c8] sm:$0xff]
    %v277 = vld [vmem:[#allocation6 + $0x5d0] sm:$0xff]
    %v278 = vld [vmem:[#allocation6 + $0x5d8] sm:$0xff]
    %v279 = vld [vmem:[#allocation6 + $0x5e0] sm:$0xff]
    %v280 = vld [vmem:[#allocation6 + $0x5e8] sm:$0xff]
    %v281 = vld [vmem:[#allocation6 + $0x5f0] sm:$0xff]
    %v282 = vld [vmem:[#allocation6 + $0x5f8] sm:$0xff]
    %v283 = vld [vmem:[#allocation6 + $0x600] sm:$0xff]
    %v284 = vld [vmem:[#allocation6 + $0x608] sm:$0xff]
    %v285 = vld [vmem:[#allocation6 + $0x610] sm:$0xff]
    %v286 = vld [vmem:[#allocation6 + $0x618] sm:$0xff]
    %v287 = vld [vmem:[#allocation6 + $0x620] sm:$0xff]
    %v288 = vld [vmem:[#allocation6 + $0x628] sm:$0xff]
    %v289 = vld [vmem:[#allocation6 + $0x630] sm:$0xff]
    %v290 = vld [vmem:[#allocation6 + $0x638] sm:$0xff]
    %v291 = vld [vmem:[#allocation6 + $0x640] sm:$0xff]
    %v292 = vld [vmem:[#allocation6 + $0x648] sm:$0xff]
    %v293 = vld [vmem:[#allocation6 + $0x650] sm:$0xff]
    %v294 = vld [vmem:[#allocation6 + $0x658] sm:$0xff]
    %v295 = vld [vmem:[#allocation6 + $0x660] sm:$0xff]
    %v296 = vld [vmem:[#allocation6 + $0x668] sm:$0xff]
    %v297 = vld [vmem:[#allocation6 + $0x670] sm:$0xff]
    %v298 = vld [vmem:[#allocation6 + $0x678] sm:$0xff]
    %v299 = vld [vmem:[#allocation6 + $0x680] sm:$0xff]
    %v300 = vld [vmem:[#allocation6 + $0x688] sm:$0xff]
    %v301 = vld [vmem:[#allocation6 + $0x690] sm:$0xff]
    %v302 = vld [vmem:[#allocation6 + $0x698] sm:$0xff]
    %v303 = vld [vmem:[#allocation6 + $0x6a0] sm:$0xff]
    %v304 = vld [vmem:[#allocation6 + $0x6a8] sm:$0xff]
    %v305 = vld [vmem:[#allocation6 + $0x6b0] sm:$0xff]
    %v306 = vld [vmem:[#allocation6 + $0x6b8] sm:$0xff]
    %v307 = vld [vmem:[#allocation6 + $0x6c0] sm:$0xff]
    %v308 = vld [vmem:[#allocation6 + $0x6c8] sm:$0xff]
    %v309 = vld [vmem:[#allocation6 + $0x6d0] sm:$0xff]
    %v310 = vld [vmem:[#allocation6 + $0x6d8] sm:$0xff]
    %v311 = vld [vmem:[#allocation6 + $0x6e0] sm:$0xff]
    %v312 = vld [vmem:[#allocation6 + $0x6e8] sm:$0xff]
    %v313 = vld [vmem:[#allocation6 + $0x6f0] sm:$0xff]
    %v314 = vld [vmem:[#allocation6 + $0x6f8] sm:$0xff]
    %v315 = vld [vmem:[#allocation6 + $0x700] sm:$0xff]
    %v316 = vld [vmem:[#allocation6 + $0x708] sm:$0xff]
    %v317 = vld [vmem:[#allocation6 + $0x710] sm:$0xff]
    %v318 = vld [vmem:[#allocation6 + $0x718] sm:$0xff]
    %v319 = vld [vmem:[#allocation6 + $0x720] sm:$0xff]
    %v320 = vld [vmem:[#allocation6 + $0x728] sm:$0xff]
    %v321 = vld [vmem:[#allocation6 + $0x730] sm:$0xff]
    %v322 = vld [vmem:[#allocation6 + $0x738] sm:$0xff]
    %v323 = vld [vmem:[#allocation6 + $0x740] sm:$0xff]
    %v324 = vld [vmem:[#allocation6 + $0x748] sm:$0xff]
    %v325 = vld [vmem:[#allocation6 + $0x750] sm:$0xff]
    %v326 = vld [vmem:[#allocation6 + $0x758] sm:$0xff]
    %v327 = vld [vmem:[#allocation6 + $0x760] sm:$0xff]
    %v328 = vld [vmem:[#allocation6 + $0x768] sm:$0xff]
    %v329 = vld [vmem:[#allocation6 + $0x770] sm:$0xff]
    %v330 = vld [vmem:[#allocation6 + $0x778] sm:$0xff]
    %v331 = vld [vmem:[#allocation6 + $0x780] sm:$0xff]
    %v332 = vld [vmem:[#allocation6 + $0x788] sm:$0xff]
    %v333 = vld [vmem:[#allocation6 + $0x790] sm:$0xff]
    %v334 = vld [vmem:[#allocation6 + $0x798] sm:$0xff]
    %v335 = vld [vmem:[#allocation6 + $0x7a0] sm:$0xff]
    %v336 = vld [vmem:[#allocation6 + $0x7a8] sm:$0xff]
    %v337 = vld [vmem:[#allocation6 + $0x7b0] sm:$0xff]
    %v338 = vld [vmem:[#allocation6 + $0x7b8] sm:$0xff]
    %v339 = vld [vmem:[#allocation6 + $0x7c0] sm:$0xff]
    %v340 = vld [vmem:[#allocation6 + $0x7c8] sm:$0xff]
    %v341 = vld [vmem:[#allocation6 + $0x7d0] sm:$0xff]
    %v342 = vld [vmem:[#allocation6 + $0x7d8] sm:$0xff]
    %v343 = vld [vmem:[#allocation6 + $0x7e0] sm:$0xff]
    %v344 = vld [vmem:[#allocation6 + $0x7e8] sm:$0xff]
    %v345 = vld [vmem:[#allocation6 + $0x7f0] sm:$0xff]
    %v346 = vld [vmem:[#allocation6 + $0x7f8] sm:$0xff]
    %v603 = vunpack.c.l.b16 %v91
    %v604 = vunpack.c.h.b16 %v91
    %v605 = vunpack.c.l.b16 %v92
    %v606 = vunpack.c.h.b16 %v92
    %v607 = vunpack.c.l.b16 %v93
    %v608 = vunpack.c.h.b16 %v93
    %v609 = vunpack.c.l.b16 %v94
    %v610 = vunpack.c.h.b16 %v94
    %v611 = vunpack.c.l.b16 %v95
    %v612 = vunpack.c.h.b16 %v95
    %v613 = vunpack.c.l.b16 %v96
    %v614 = vunpack.c.h.b16 %v96
    %v615 = vunpack.c.l.b16 %v97
    %v616 = vunpack.c.h.b16 %v97
    %v617 = vunpack.c.l.b16 %v98
    %v618 = vunpack.c.h.b16 %v98
    %v619 = vunpack.c.l.b16 %v99
    %v620 = vunpack.c.h.b16 %v99
    %v621 = vunpack.c.l.b16 %v100
    %v622 = vunpack.c.h.b16 %v100
    %v623 = vunpack.c.l.b16 %v101
    %v624 = vunpack.c.h.b16 %v101
    %v625 = vunpack.c.l.b16 %v102
    %v626 = vunpack.c.h.b16 %v102
    %v627 = vunpack.c.l.b16 %v103
    %v628 = vunpack.c.h.b16 %v103
    %v629 = vunpack.c.l.b16 %v104
    %v630 = vunpack.c.h.b16 %v104
    %v631 = vunpack.c.l.b16 %v105
    %v632 = vunpack.c.h.b16 %v105
    %v633 = vunpack.c.l.b16 %v106
    %v634 = vunpack.c.h.b16 %v106
    %v635 = vunpack.c.l.b16 %v107
    %v636 = vunpack.c.h.b16 %v107
    %v637 = vunpack.c.l.b16 %v108
    %v638 = vunpack.c.h.b16 %v108
    %v639 = vunpack.c.l.b16 %v109
    %v640 = vunpack.c.h.b16 %v109
    %v641 = vunpack.c.l.b16 %v110
    %v642 = vunpack.c.h.b16 %v110
    %v643 = vunpack.c.l.b16 %v111
    %v644 = vunpack.c.h.b16 %v111
    %v645 = vunpack.c.l.b16 %v112
    %v646 = vunpack.c.h.b16 %v112
    %v647 = vunpack.c.l.b16 %v113
    %v648 = vunpack.c.h.b16 %v113
    %v649 = vunpack.c.l.b16 %v114
    %v650 = vunpack.c.h.b16 %v114
    %v651 = vunpack.c.l.b16 %v115
    %v652 = vunpack.c.h.b16 %v115
    %v653 = vunpack.c.l.b16 %v116
    %v654 = vunpack.c.h.b16 %v116
    %v655 = vunpack.c.l.b16 %v117
    %v656 = vunpack.c.h.b16 %v117
    %v657 = vunpack.c.l.b16 %v118
    %v658 = vunpack.c.h.b16 %v118
    %v659 = vunpack.c.l.b16 %v119
    %v660 = vunpack.c.h.b16 %v119
    %v661 = vunpack.c.l.b16 %v120
    %v662 = vunpack.c.h.b16 %v120
    %v663 = vunpack.c.l.b16 %v121
    %v664 = vunpack.c.h.b16 %v121
    %v665 = vunpack.c.l.b16 %v122
    %v666 = vunpack.c.h.b16 %v122
    %v667 = vunpack.c.l.b16 %v123
    %v668 = vunpack.c.h.b16 %v123
    %v669 = vunpack.c.l.b16 %v124
    %v670 = vunpack.c.h.b16 %v124
    %v671 = vunpack.c.l.b16 %v125
    %v672 = vunpack.c.h.b16 %v125
    %v673 = vunpack.c.l.b16 %v126
    %v674 = vunpack.c.h.b16 %v126
    %v675 = vunpack.c.l.b16 %v127
    %v676 = vunpack.c.h.b16 %v127
    %v677 = vunpack.c.l.b16 %v128
    %v678 = vunpack.c.h.b16 %v128
    %v679 = vunpack.c.l.b16 %v129
    %v680 = vunpack.c.h.b16 %v129
    %v681 = vunpack.c.l.b16 %v130
    %v682 = vunpack.c.h.b16 %v130
    %v683 = vunpack.c.l.b16 %v131
    %v684 = vunpack.c.h.b16 %v131
    %v685 = vunpack.c.l.b16 %v132
    %v686 = vunpack.c.h.b16 %v132
    %v687 = vunpack.c.l.b16 %v133
    %v688 = vunpack.c.h.b16 %v133
    %v689 = vunpack.c.l.b16 %v134
    %v690 = vunpack.c.h.b16 %v134
    %v691 = vunpack.c.l.b16 %v135
    %v692 = vunpack.c.h.b16 %v135
    %v693 = vunpack.c.l.b16 %v136
    %v694 = vunpack.c.h.b16 %v136
    %v695 = vunpack.c.l.b16 %v137
    %v696 = vunpack.c.h.b16 %v137
    %v697 = vunpack.c.l.b16 %v138
    %v698 = vunpack.c.h.b16 %v138
    %v699 = vunpack.c.l.b16 %v139
    %v700 = vunpack.c.h.b16 %v139
    %v701 = vunpack.c.l.b16 %v140
    %v702 = vunpack.c.h.b16 %v140
    %v703 = vunpack.c.l.b16 %v141
    %v704 = vunpack.c.h.b16 %v141
    %v705 = vunpack.c.l.b16 %v142
    %v706 = vunpack.c.h.b16 %v142
    %v707 = vunpack.c.l.b16 %v143
    %v708 = vunpack.c.h.b16 %v143
    %v709 = vunpack.c.l.b16 %v144
    %v710 = vunpack.c.h.b16 %v144
    %v711 = vunpack.c.l.b16 %v145
    %v712 = vunpack.c.h.b16 %v145
    %v713 = vunpack.c.l.b16 %v146
    %v714 = vunpack.c.h.b16 %v146
    %v715 = vunpack.c.l.b16 %v147
    %v716 = vunpack.c.h.b16 %v147
    %v717 = vunpack.c.l.b16 %v148
    %v718 = vunpack.c.h.b16 %v148
    %v719 = vunpack.c.l.b16 %v149
    %v720 = vunpack.c.h.b16 %v149
    %v721 = vunpack.c.l.b16 %v150
    %v722 = vunpack.c.h.b16 %v150
    %v723 = vunpack.c.l.b16 %v151
    %v724 = vunpack.c.h.b16 %v151
    %v725 = vunpack.c.l.b16 %v152
    %v726 = vunpack.c.h.b16 %v152
    %v727 = vunpack.c.l.b16 %v153
    %v728 = vunpack.c.h.b16 %v153
    %v729 = vunpack.c.l.b16 %v154
    %v730 = vunpack.c.h.b16 %v154
    %v731 = vunpack.c.l.b16 %v155
    %v732 = vunpack.c.h.b16 %v155
    %v733 = vunpack.c.l.b16 %v156
    %v734 = vunpack.c.h.b16 %v156
    %v735 = vunpack.c.l.b16 %v157
    %v736 = vunpack.c.h.b16 %v157
    %v737 = vunpack.c.l.b16 %v158
    %v738 = vunpack.c.h.b16 %v158
    %v739 = vunpack.c.l.b16 %v159
    %v740 = vunpack.c.h.b16 %v159
    %v741 = vunpack.c.l.b16 %v160
    %v742 = vunpack.c.h.b16 %v160
    %v743 = vunpack.c.l.b16 %v161
    %v744 = vunpack.c.h.b16 %v161
    %v745 = vunpack.c.l.b16 %v162
    %v746 = vunpack.c.h.b16 %v162
    %v747 = vunpack.c.l.b16 %v163
    %v748 = vunpack.c.h.b16 %v163
    %v749 = vunpack.c.l.b16 %v164
    %v750 = vunpack.c.h.b16 %v164
    %v751 = vunpack.c.l.b16 %v165
    %v752 = vunpack.c.h.b16 %v165
    %v753 = vunpack.c.l.b16 %v166
    %v754 = vunpack.c.h.b16 %v166
    %v755 = vunpack.c.l.b16 %v167
    %v756 = vunpack.c.h.b16 %v167
    %v757 = vunpack.c.l.b16 %v168
    %v758 = vunpack.c.h.b16 %v168
    %v759 = vunpack.c.l.b16 %v169
    %v760 = vunpack.c.h.b16 %v169
    %v761 = vunpack.c.l.b16 %v170
    %v762 = vunpack.c.h.b16 %v170
    %v763 = vunpack.c.l.b16 %v171
    %v764 = vunpack.c.h.b16 %v171
    %v765 = vunpack.c.l.b16 %v172
    %v766 = vunpack.c.h.b16 %v172
    %v767 = vunpack.c.l.b16 %v173
    %v768 = vunpack.c.h.b16 %v173
    %v769 = vunpack.c.l.b16 %v174
    %v770 = vunpack.c.h.b16 %v174
    %v771 = vunpack.c.l.b16 %v175
    %v772 = vunpack.c.h.b16 %v175
    %v773 = vunpack.c.l.b16 %v176
    %v774 = vunpack.c.h.b16 %v176
    %v775 = vunpack.c.l.b16 %v177
    %v776 = vunpack.c.h.b16 %v177
    %v777 = vunpack.c.l.b16 %v178
    %v778 = vunpack.c.h.b16 %v178
    %v779 = vunpack.c.l.b16 %v179
    %v780 = vunpack.c.h.b16 %v179
    %v781 = vunpack.c.l.b16 %v180
    %v782 = vunpack.c.h.b16 %v180
    %v783 = vunpack.c.l.b16 %v181
    %v784 = vunpack.c.h.b16 %v181
    %v785 = vunpack.c.l.b16 %v182
    %v786 = vunpack.c.h.b16 %v182
    %v787 = vunpack.c.l.b16 %v183
    %v788 = vunpack.c.h.b16 %v183
    %v789 = vunpack.c.l.b16 %v184
    %v790 = vunpack.c.h.b16 %v184
    %v791 = vunpack.c.l.b16 %v185
    %v792 = vunpack.c.h.b16 %v185
    %v793 = vunpack.c.l.b16 %v186
    %v794 = vunpack.c.h.b16 %v186
    %v795 = vunpack.c.l.b16 %v187
    %v796 = vunpack.c.h.b16 %v187
    %v797 = vunpack.c.l.b16 %v188
    %v798 = vunpack.c.h.b16 %v188
    %v799 = vunpack.c.l.b16 %v189
    %v800 = vunpack.c.h.b16 %v189
    %v801 = vunpack.c.l.b16 %v190
    %v802 = vunpack.c.h.b16 %v190
    %v803 = vunpack.c.l.b16 %v191
    %v804 = vunpack.c.h.b16 %v191
    %v805 = vunpack.c.l.b16 %v192
    %v806 = vunpack.c.h.b16 %v192
    %v807 = vunpack.c.l.b16 %v193
    %v808 = vunpack.c.h.b16 %v193
    %v809 = vunpack.c.l.b16 %v194
    %v810 = vunpack.c.h.b16 %v194
    %v811 = vunpack.c.l.b16 %v195
    %v812 = vunpack.c.h.b16 %v195
    %v813 = vunpack.c.l.b16 %v196
    %v814 = vunpack.c.h.b16 %v196
    %v815 = vunpack.c.l.b16 %v197
    %v816 = vunpack.c.h.b16 %v197
    %v817 = vunpack.c.l.b16 %v198
    %v818 = vunpack.c.h.b16 %v198
    %v819 = vunpack.c.l.b16 %v199
    %v820 = vunpack.c.h.b16 %v199
    %v821 = vunpack.c.l.b16 %v200
    %v822 = vunpack.c.h.b16 %v200
    %v823 = vunpack.c.l.b16 %v201
    %v824 = vunpack.c.h.b16 %v201
    %v825 = vunpack.c.l.b16 %v202
    %v826 = vunpack.c.h.b16 %v202
    %v827 = vunpack.c.l.b16 %v203
    %v828 = vunpack.c.h.b16 %v203
    %v829 = vunpack.c.l.b16 %v204
    %v830 = vunpack.c.h.b16 %v204
    %v831 = vunpack.c.l.b16 %v205
    %v832 = vunpack.c.h.b16 %v205
    %v833 = vunpack.c.l.b16 %v206
    %v834 = vunpack.c.h.b16 %v206
    %v835 = vunpack.c.l.b16 %v207
    %v836 = vunpack.c.h.b16 %v207
    %v837 = vunpack.c.l.b16 %v208
    %v838 = vunpack.c.h.b16 %v208
    %v839 = vunpack.c.l.b16 %v209
    %v840 = vunpack.c.h.b16 %v209
    %v841 = vunpack.c.l.b16 %v210
    %v842 = vunpack.c.h.b16 %v210
    %v843 = vunpack.c.l.b16 %v211
    %v844 = vunpack.c.h.b16 %v211
    %v845 = vunpack.c.l.b16 %v212
    %v846 = vunpack.c.h.b16 %v212
    %v847 = vunpack.c.l.b16 %v213
    %v848 = vunpack.c.h.b16 %v213
    %v849 = vunpack.c.l.b16 %v214
    %v850 = vunpack.c.h.b16 %v214
    %v851 = vunpack.c.l.b16 %v215
    %v852 = vunpack.c.h.b16 %v215
    %v853 = vunpack.c.l.b16 %v216
    %v854 = vunpack.c.h.b16 %v216
    %v855 = vunpack.c.l.b16 %v217
    %v856 = vunpack.c.h.b16 %v217
    %v857 = vunpack.c.l.b16 %v218
    %v858 = vunpack.c.h.b16 %v218
    %v859 = vunpack.c.l.b16 %v219
    %v860 = vunpack.c.h.b16 %v219
    %v861 = vunpack.c.l.b16 %v220
    %v862 = vunpack.c.h.b16 %v220
    %v863 = vunpack.c.l.b16 %v221
    %v864 = vunpack.c.h.b16 %v221
    %v865 = vunpack.c.l.b16 %v222
    %v866 = vunpack.c.h.b16 %v222
    %v867 = vunpack.c.l.b16 %v223
    %v868 = vunpack.c.h.b16 %v223
    %v869 = vunpack.c.l.b16 %v224
    %v870 = vunpack.c.h.b16 %v224
    %v871 = vunpack.c.l.b16 %v225
    %v872 = vunpack.c.h.b16 %v225
    %v873 = vunpack.c.l.b16 %v226
    %v874 = vunpack.c.h.b16 %v226
    %v875 = vunpack.c.l.b16 %v227
    %v876 = vunpack.c.h.b16 %v227
    %v877 = vunpack.c.l.b16 %v228
    %v878 = vunpack.c.h.b16 %v228
    %v879 = vunpack.c.l.b16 %v229
    %v880 = vunpack.c.h.b16 %v229
    %v881 = vunpack.c.l.b16 %v230
    %v882 = vunpack.c.h.b16 %v230
    %v883 = vunpack.c.l.b16 %v231
    %v884 = vunpack.c.h.b16 %v231
    %v885 = vunpack.c.l.b16 %v232
    %v886 = vunpack.c.h.b16 %v232
    %v887 = vunpack.c.l.b16 %v233
    %v888 = vunpack.c.h.b16 %v233
    %v889 = vunpack.c.l.b16 %v234
    %v890 = vunpack.c.h.b16 %v234
    %v891 = vunpack.c.l.b16 %v235
    %v892 = vunpack.c.h.b16 %v235
    %v893 = vunpack.c.l.b16 %v236
    %v894 = vunpack.c.h.b16 %v236
    %v895 = vunpack.c.l.b16 %v237
    %v896 = vunpack.c.h.b16 %v237
    %v897 = vunpack.c.l.b16 %v238
    %v898 = vunpack.c.h.b16 %v238
    %v899 = vunpack.c.l.b16 %v239
    %v900 = vunpack.c.h.b16 %v239
    %v901 = vunpack.c.l.b16 %v240
    %v902 = vunpack.c.h.b16 %v240
    %v903 = vunpack.c.l.b16 %v241
    %v904 = vunpack.c.h.b16 %v241
    %v905 = vunpack.c.l.b16 %v242
    %v906 = vunpack.c.h.b16 %v242
    %v907 = vunpack.c.l.b16 %v243
    %v908 = vunpack.c.h.b16 %v243
    %v909 = vunpack.c.l.b16 %v244
    %v910 = vunpack.c.h.b16 %v244
    %v911 = vunpack.c.l.b16 %v245
    %v912 = vunpack.c.h.b16 %v245
    %v913 = vunpack.c.l.b16 %v246
    %v914 = vunpack.c.h.b16 %v246
    %v915 = vunpack.c.l.b16 %v247
    %v916 = vunpack.c.h.b16 %v247
    %v917 = vunpack.c.l.b16 %v248
    %v918 = vunpack.c.h.b16 %v248
    %v919 = vunpack.c.l.b16 %v249
    %v920 = vunpack.c.h.b16 %v249
    %v921 = vunpack.c.l.b16 %v250
    %v922 = vunpack.c.h.b16 %v250
    %v923 = vunpack.c.l.b16 %v251
    %v924 = vunpack.c.h.b16 %v251
    %v925 = vunpack.c.l.b16 %v252
    %v926 = vunpack.c.h.b16 %v252
    %v927 = vunpack.c.l.b16 %v253
    %v928 = vunpack.c.h.b16 %v253
    %v929 = vunpack.c.l.b16 %v254
    %v930 = vunpack.c.h.b16 %v254
    %v931 = vunpack.c.l.b16 %v255
    %v932 = vunpack.c.h.b16 %v255
    %v933 = vunpack.c.l.b16 %v256
    %v934 = vunpack.c.h.b16 %v256
    %v935 = vunpack.c.l.b16 %v257
    %v936 = vunpack.c.h.b16 %v257
    %v937 = vunpack.c.l.b16 %v258
    %v938 = vunpack.c.h.b16 %v258
    %v939 = vunpack.c.l.b16 %v259
    %v940 = vunpack.c.h.b16 %v259
    %v941 = vunpack.c.l.b16 %v260
    %v942 = vunpack.c.h.b16 %v260
    %v943 = vunpack.c.l.b16 %v261
    %v944 = vunpack.c.h.b16 %v261
    %v945 = vunpack.c.l.b16 %v262
    %v946 = vunpack.c.h.b16 %v262
    %v947 = vunpack.c.l.b16 %v263
    %v948 = vunpack.c.h.b16 %v263
    %v949 = vunpack.c.l.b16 %v264
    %v950 = vunpack.c.h.b16 %v264
    %v951 = vunpack.c.l.b16 %v265
    %v952 = vunpack.c.h.b16 %v265
    %v953 = vunpack.c.l.b16 %v266
    %v954 = vunpack.c.h.b16 %v266
    %v955 = vunpack.c.l.b16 %v267
    %v956 = vunpack.c.h.b16 %v267
    %v957 = vunpack.c.l.b16 %v268
    %v958 = vunpack.c.h.b16 %v268
    %v959 = vunpack.c.l.b16 %v269
    %v960 = vunpack.c.h.b16 %v269
    %v961 = vunpack.c.l.b16 %v270
    %v962 = vunpack.c.h.b16 %v270
    %v963 = vunpack.c.l.b16 %v271
    %v964 = vunpack.c.h.b16 %v271
    %v965 = vunpack.c.l.b16 %v272
    %v966 = vunpack.c.h.b16 %v272
    %v967 = vunpack.c.l.b16 %v273
    %v968 = vunpack.c.h.b16 %v273
    %v969 = vunpack.c.l.b16 %v274
    %v970 = vunpack.c.h.b16 %v274
    %v971 = vunpack.c.l.b16 %v275
    %v972 = vunpack.c.h.b16 %v275
    %v973 = vunpack.c.l.b16 %v276
    %v974 = vunpack.c.h.b16 %v276
    %v975 = vunpack.c.l.b16 %v277
    %v976 = vunpack.c.h.b16 %v277
    %v977 = vunpack.c.l.b16 %v278
    %v978 = vunpack.c.h.b16 %v278
    %v979 = vunpack.c.l.b16 %v279
    %v980 = vunpack.c.h.b16 %v279
    %v981 = vunpack.c.l.b16 %v280
    %v982 = vunpack.c.h.b16 %v280
    %v983 = vunpack.c.l.b16 %v281
    %v984 = vunpack.c.h.b16 %v281
    %v985 = vunpack.c.l.b16 %v282
    %v986 = vunpack.c.h.b16 %v282
    %v987 = vunpack.c.l.b16 %v283
    %v988 = vunpack.c.h.b16 %v283
    %v989 = vunpack.c.l.b16 %v284
    %v990 = vunpack.c.h.b16 %v284
    %v991 = vunpack.c.l.b16 %v285
    %v992 = vunpack.c.h.b16 %v285
    %v993 = vunpack.c.l.b16 %v286
    %v994 = vunpack.c.h.b16 %v286
    %v995 = vunpack.c.l.b16 %v287
    %v996 = vunpack.c.h.b16 %v287
    %v997 = vunpack.c.l.b16 %v288
    %v998 = vunpack.c.h.b16 %v288
    %v999 = vunpack.c.l.b16 %v289
    %v1000 = vunpack.c.h.b16 %v289
    %v1001 = vunpack.c.l.b16 %v290
    %v1002 = vunpack.c.h.b16 %v290
    %v1003 = vunpack.c.l.b16 %v291
    %v1004 = vunpack.c.h.b16 %v291
    %v1005 = vunpack.c.l.b16 %v292
    %v1006 = vunpack.c.h.b16 %v292
    %v1007 = vunpack.c.l.b16 %v293
    %v1008 = vunpack.c.h.b16 %v293
    %v1009 = vunpack.c.l.b16 %v294
    %v1010 = vunpack.c.h.b16 %v294
    %v1011 = vunpack.c.l.b16 %v295
    %v1012 = vunpack.c.h.b16 %v295
    %v1013 = vunpack.c.l.b16 %v296
    %v1014 = vunpack.c.h.b16 %v296
    %v1015 = vunpack.c.l.b16 %v297
    %v1016 = vunpack.c.h.b16 %v297
    %v1017 = vunpack.c.l.b16 %v298
    %v1018 = vunpack.c.h.b16 %v298
    %v1019 = vunpack.c.l.b16 %v299
    %v1020 = vunpack.c.h.b16 %v299
    %v1021 = vunpack.c.l.b16 %v300
    %v1022 = vunpack.c.h.b16 %v300
    %v1023 = vunpack.c.l.b16 %v301
    %v1024 = vunpack.c.h.b16 %v301
    %v1025 = vunpack.c.l.b16 %v302
    %v1026 = vunpack.c.h.b16 %v302
    %v1027 = vunpack.c.l.b16 %v303
    %v1028 = vunpack.c.h.b16 %v303
    %v1029 = vunpack.c.l.b16 %v304
    %v1030 = vunpack.c.h.b16 %v304
    %v1031 = vunpack.c.l.b16 %v305
    %v1032 = vunpack.c.h.b16 %v305
    %v1033 = vunpack.c.l.b16 %v306
    %v1034 = vunpack.c.h.b16 %v306
    %v1035 = vunpack.c.l.b16 %v307
    %v1036 = vunpack.c.h.b16 %v307
    %v1037 = vunpack.c.l.b16 %v308
    %v1038 = vunpack.c.h.b16 %v308
    %v1039 = vunpack.c.l.b16 %v309
    %v1040 = vunpack.c.h.b16 %v309
    %v1041 = vunpack.c.l.b16 %v310
    %v1042 = vunpack.c.h.b16 %v310
    %v1043 = vunpack.c.l.b16 %v311
    %v1044 = vunpack.c.h.b16 %v311
    %v1045 = vunpack.c.l.b16 %v312
    %v1046 = vunpack.c.h.b16 %v312
    %v1047 = vunpack.c.l.b16 %v313
    %v1048 = vunpack.c.h.b16 %v313
    %v1049 = vunpack.c.l.b16 %v314
    %v1050 = vunpack.c.h.b16 %v314
    %v1051 = vunpack.c.l.b16 %v315
    %v1052 = vunpack.c.h.b16 %v315
    %v1053 = vunpack.c.l.b16 %v316
    %v1054 = vunpack.c.h.b16 %v316
    %v1055 = vunpack.c.l.b16 %v317
    %v1056 = vunpack.c.h.b16 %v317
    %v1057 = vunpack.c.l.b16 %v318
    %v1058 = vunpack.c.h.b16 %v318
    %v1059 = vunpack.c.l.b16 %v319
    %v1060 = vunpack.c.h.b16 %v319
    %v1061 = vunpack.c.l.b16 %v320
    %v1062 = vunpack.c.h.b16 %v320
    %v1063 = vunpack.c.l.b16 %v321
    %v1064 = vunpack.c.h.b16 %v321
    %v1065 = vunpack.c.l.b16 %v322
    %v1066 = vunpack.c.h.b16 %v322
    %v1067 = vunpack.c.l.b16 %v323
    %v1068 = vunpack.c.h.b16 %v323
    %v1069 = vunpack.c.l.b16 %v324
    %v1070 = vunpack.c.h.b16 %v324
    %v1071 = vunpack.c.l.b16 %v325
    %v1072 = vunpack.c.h.b16 %v325
    %v1073 = vunpack.c.l.b16 %v326
    %v1074 = vunpack.c.h.b16 %v326
    %v1075 = vunpack.c.l.b16 %v327
    %v1076 = vunpack.c.h.b16 %v327
    %v1077 = vunpack.c.l.b16 %v328
    %v1078 = vunpack.c.h.b16 %v328
    %v1079 = vunpack.c.l.b16 %v329
    %v1080 = vunpack.c.h.b16 %v329
    %v1081 = vunpack.c.l.b16 %v330
    %v1082 = vunpack.c.h.b16 %v330
    %v1083 = vunpack.c.l.b16 %v331
    %v1084 = vunpack.c.h.b16 %v331
    %v1085 = vunpack.c.l.b16 %v332
    %v1086 = vunpack.c.h.b16 %v332
    %v1087 = vunpack.c.l.b16 %v333
    %v1088 = vunpack.c.h.b16 %v333
    %v1089 = vunpack.c.l.b16 %v334
    %v1090 = vunpack.c.h.b16 %v334
    %v1091 = vunpack.c.l.b16 %v335
    %v1092 = vunpack.c.h.b16 %v335
    %v1093 = vunpack.c.l.b16 %v336
    %v1094 = vunpack.c.h.b16 %v336
    %v1095 = vunpack.c.l.b16 %v337
    %v1096 = vunpack.c.h.b16 %v337
    %v1097 = vunpack.c.l.b16 %v338
    %v1098 = vunpack.c.h.b16 %v338
    %v1099 = vunpack.c.l.b16 %v339
    %v1100 = vunpack.c.h.b16 %v339
    %v1101 = vunpack.c.l.b16 %v340
    %v1102 = vunpack.c.h.b16 %v340
    %v1103 = vunpack.c.l.b16 %v341
    %v1104 = vunpack.c.h.b16 %v341
    %v1105 = vunpack.c.l.b16 %v342
    %v1106 = vunpack.c.h.b16 %v342
    %v1107 = vunpack.c.l.b16 %v343
    %v1108 = vunpack.c.h.b16 %v343
    %v1109 = vunpack.c.l.b16 %v344
    %v1110 = vunpack.c.h.b16 %v344
    %v1111 = vunpack.c.l.b16 %v345
    %v1112 = vunpack.c.h.b16 %v345
    %v1113 = vunpack.c.l.b16 %v346
    %v1114 = vunpack.c.h.b16 %v346
    %v1115 = vpack.c.b16 %v607, %v603
    %v1116 = vpack.c.b16 %v608, %v604
    %v1117 = vpack.c.b16 %v609, %v605
    %v1118 = vpack.c.b16 %v610, %v606
    %v1119 = vpack.c.b16 %v615, %v611
    %v1120 = vpack.c.b16 %v616, %v612
    %v1121 = vpack.c.b16 %v617, %v613
    %v1122 = vpack.c.b16 %v618, %v614
    %v1123 = vpack.c.b16 %v623, %v619
    %v1124 = vpack.c.b16 %v624, %v620
    %v1125 = vpack.c.b16 %v625, %v621
    %v1126 = vpack.c.b16 %v626, %v622
    %v1127 = vpack.c.b16 %v631, %v627
    %v1128 = vpack.c.b16 %v632, %v628
    %v1129 = vpack.c.b16 %v633, %v629
    %v1130 = vpack.c.b16 %v634, %v630
    %v1131 = vpack.c.b16 %v639, %v635
    %v1132 = vpack.c.b16 %v640, %v636
    %v1133 = vpack.c.b16 %v641, %v637
    %v1134 = vpack.c.b16 %v642, %v638
    %v1135 = vpack.c.b16 %v647, %v643
    %v1136 = vpack.c.b16 %v648, %v644
    %v1137 = vpack.c.b16 %v649, %v645
    %v1138 = vpack.c.b16 %v650, %v646
    %v1139 = vpack.c.b16 %v655, %v651
    %v1140 = vpack.c.b16 %v656, %v652
    %v1141 = vpack.c.b16 %v657, %v653
    %v1142 = vpack.c.b16 %v658, %v654
    %v1143 = vpack.c.b16 %v663, %v659
    %v1144 = vpack.c.b16 %v664, %v660
    %v1145 = vpack.c.b16 %v665, %v661
    %v1146 = vpack.c.b16 %v666, %v662
    %v1147 = vpack.c.b16 %v671, %v667
    %v1148 = vpack.c.b16 %v672, %v668
    %v1149 = vpack.c.b16 %v673, %v669
    %v1150 = vpack.c.b16 %v674, %v670
    %v1151 = vpack.c.b16 %v679, %v675
    %v1152 = vpack.c.b16 %v680, %v676
    %v1153 = vpack.c.b16 %v681, %v677
    %v1154 = vpack.c.b16 %v682, %v678
    %v1155 = vpack.c.b16 %v687, %v683
    %v1156 = vpack.c.b16 %v688, %v684
    %v1157 = vpack.c.b16 %v689, %v685
    %v1158 = vpack.c.b16 %v690, %v686
    %v1159 = vpack.c.b16 %v695, %v691
    %v1160 = vpack.c.b16 %v696, %v692
    %v1161 = vpack.c.b16 %v697, %v693
    %v1162 = vpack.c.b16 %v698, %v694
    %v1163 = vpack.c.b16 %v703, %v699
    %v1164 = vpack.c.b16 %v704, %v700
    %v1165 = vpack.c.b16 %v705, %v701
    %v1166 = vpack.c.b16 %v706, %v702
    %v1167 = vpack.c.b16 %v711, %v707
    %v1168 = vpack.c.b16 %v712, %v708
    %v1169 = vpack.c.b16 %v713, %v709
    %v1170 = vpack.c.b16 %v714, %v710
    %v1171 = vpack.c.b16 %v719, %v715
    %v1172 = vpack.c.b16 %v720, %v716
    %v1173 = vpack.c.b16 %v721, %v717
    %v1174 = vpack.c.b16 %v722, %v718
    %v1175 = vpack.c.b16 %v727, %v723
    %v1176 = vpack.c.b16 %v728, %v724
    %v1177 = vpack.c.b16 %v729, %v725
    %v1178 = vpack.c.b16 %v730, %v726
    %v1179 = vpack.c.b16 %v735, %v731
    %v1180 = vpack.c.b16 %v736, %v732
    %v1181 = vpack.c.b16 %v737, %v733
    %v1182 = vpack.c.b16 %v738, %v734
    %v1183 = vpack.c.b16 %v743, %v739
    %v1184 = vpack.c.b16 %v744, %v740
    %v1185 = vpack.c.b16 %v745, %v741
    %v1186 = vpack.c.b16 %v746, %v742
    %v1187 = vpack.c.b16 %v751, %v747
    %v1188 = vpack.c.b16 %v752, %v748
    %v1189 = vpack.c.b16 %v753, %v749
    %v1190 = vpack.c.b16 %v754, %v750
    %v1191 = vpack.c.b16 %v759, %v755
    %v1192 = vpack.c.b16 %v760, %v756
    %v1193 = vpack.c.b16 %v761, %v757
    %v1194 = vpack.c.b16 %v762, %v758
    %v1195 = vpack.c.b16 %v767, %v763
    %v1196 = vpack.c.b16 %v768, %v764
    %v1197 = vpack.c.b16 %v769, %v765
    %v1198 = vpack.c.b16 %v770, %v766
    %v1199 = vpack.c.b16 %v775, %v771
    %v1200 = vpack.c.b16 %v776, %v772
    %v1201 = vpack.c.b16 %v777, %v773
    %v1202 = vpack.c.b16 %v778, %v774
    %v1203 = vpack.c.b16 %v783, %v779
    %v1204 = vpack.c.b16 %v784, %v780
    %v1205 = vpack.c.b16 %v785, %v781
    %v1206 = vpack.c.b16 %v786, %v782
    %v1207 = vpack.c.b16 %v791, %v787
    %v1208 = vpack.c.b16 %v792, %v788
    %v1209 = vpack.c.b16 %v793, %v789
    %v1210 = vpack.c.b16 %v794, %v790
    %v1211 = vpack.c.b16 %v799, %v795
    %v1212 = vpack.c.b16 %v800, %v796
    %v1213 = vpack.c.b16 %v801, %v797
    %v1214 = vpack.c.b16 %v802, %v798
    %v1215 = vpack.c.b16 %v807, %v803
    %v1216 = vpack.c.b16 %v808, %v804
    %v1217 = vpack.c.b16 %v809, %v805
    %v1218 = vpack.c.b16 %v810, %v806
    %v1219 = vpack.c.b16 %v815, %v811
    %v1220 = vpack.c.b16 %v816, %v812
    %v1221 = vpack.c.b16 %v817, %v813
    %v1222 = vpack.c.b16 %v818, %v814
    %v1223 = vpack.c.b16 %v823, %v819
    %v1224 = vpack.c.b16 %v824, %v820
    %v1225 = vpack.c.b16 %v825, %v821
    %v1226 = vpack.c.b16 %v826, %v822
    %v1227 = vpack.c.b16 %v831, %v827
    %v1228 = vpack.c.b16 %v832, %v828
    %v1229 = vpack.c.b16 %v833, %v829
    %v1230 = vpack.c.b16 %v834, %v830
    %v1231 = vpack.c.b16 %v839, %v835
    %v1232 = vpack.c.b16 %v840, %v836
    %v1233 = vpack.c.b16 %v841, %v837
    %v1234 = vpack.c.b16 %v842, %v838
    %v1235 = vpack.c.b16 %v847, %v843
    %v1236 = vpack.c.b16 %v848, %v844
    %v1237 = vpack.c.b16 %v849, %v845
    %v1238 = vpack.c.b16 %v850, %v846
    %v1239 = vpack.c.b16 %v855, %v851
    %v1240 = vpack.c.b16 %v856, %v852
    %v1241 = vpack.c.b16 %v857, %v853
    %v1242 = vpack.c.b16 %v858, %v854
    %v1243 = vpack.c.b16 %v863, %v859
    %v1244 = vpack.c.b16 %v864, %v860
    %v1245 = vpack.c.b16 %v865, %v861
    %v1246 = vpack.c.b16 %v866, %v862
    %v1247 = vpack.c.b16 %v871, %v867
    %v1248 = vpack.c.b16 %v872, %v868
    %v1249 = vpack.c.b16 %v873, %v869
    %v1250 = vpack.c.b16 %v874, %v870
    %v1251 = vpack.c.b16 %v879, %v875
    %v1252 = vpack.c.b16 %v880, %v876
    %v1253 = vpack.c.b16 %v881, %v877
    %v1254 = vpack.c.b16 %v882, %v878
    %v1255 = vpack.c.b16 %v887, %v883
    %v1256 = vpack.c.b16 %v888, %v884
    %v1257 = vpack.c.b16 %v889, %v885
    %v1258 = vpack.c.b16 %v890, %v886
    %v1259 = vpack.c.b16 %v895, %v891
    %v1260 = vpack.c.b16 %v896, %v892
    %v1261 = vpack.c.b16 %v897, %v893
    %v1262 = vpack.c.b16 %v898, %v894
    %v1263 = vpack.c.b16 %v903, %v899
    %v1264 = vpack.c.b16 %v904, %v900
    %v1265 = vpack.c.b16 %v905, %v901
    %v1266 = vpack.c.b16 %v906, %v902
    %v1267 = vpack.c.b16 %v911, %v907
    %v1268 = vpack.c.b16 %v912, %v908
    %v1269 = vpack.c.b16 %v913, %v909
    %v1270 = vpack.c.b16 %v914, %v910
    %v1271 = vpack.c.b16 %v919, %v915
    %v1272 = vpack.c.b16 %v920, %v916
    %v1273 = vpack.c.b16 %v921, %v917
    %v1274 = vpack.c.b16 %v922, %v918
    %v1275 = vpack.c.b16 %v927, %v923
    %v1276 = vpack.c.b16 %v928, %v924
    %v1277 = vpack.c.b16 %v929, %v925
    %v1278 = vpack.c.b16 %v930, %v926
    %v1279 = vpack.c.b16 %v935, %v931
    %v1280 = vpack.c.b16 %v936, %v932
    %v1281 = vpack.c.b16 %v937, %v933
    %v1282 = vpack.c.b16 %v938, %v934
    %v1283 = vpack.c.b16 %v943, %v939
    %v1284 = vpack.c.b16 %v944, %v940
    %v1285 = vpack.c.b16 %v945, %v941
    %v1286 = vpack.c.b16 %v946, %v942
    %v1287 = vpack.c.b16 %v951, %v947
    %v1288 = vpack.c.b16 %v952, %v948
    %v1289 = vpack.c.b16 %v953, %v949
    %v1290 = vpack.c.b16 %v954, %v950
    %v1291 = vpack.c.b16 %v959, %v955
    %v1292 = vpack.c.b16 %v960, %v956
    %v1293 = vpack.c.b16 %v961, %v957
    %v1294 = vpack.c.b16 %v962, %v958
    %v1295 = vpack.c.b16 %v967, %v963
    %v1296 = vpack.c.b16 %v968, %v964
    %v1297 = vpack.c.b16 %v969, %v965
    %v1298 = vpack.c.b16 %v970, %v966
    %v1299 = vpack.c.b16 %v975, %v971
    %v1300 = vpack.c.b16 %v976, %v972
    %v1301 = vpack.c.b16 %v977, %v973
    %v1302 = vpack.c.b16 %v978, %v974
    %v1303 = vpack.c.b16 %v983, %v979
    %v1304 = vpack.c.b16 %v984, %v980
    %v1305 = vpack.c.b16 %v985, %v981
    %v1306 = vpack.c.b16 %v986, %v982
    %v1307 = vpack.c.b16 %v991, %v987
    %v1308 = vpack.c.b16 %v992, %v988
    %v1309 = vpack.c.b16 %v993, %v989
    %v1310 = vpack.c.b16 %v994, %v990
    %v1311 = vpack.c.b16 %v999, %v995
    %v1312 = vpack.c.b16 %v1000, %v996
    %v1313 = vpack.c.b16 %v1001, %v997
    %v1314 = vpack.c.b16 %v1002, %v998
    %v1315 = vpack.c.b16 %v1007, %v1003
    %v1316 = vpack.c.b16 %v1008, %v1004
    %v1317 = vpack.c.b16 %v1009, %v1005
    %v1318 = vpack.c.b16 %v1010, %v1006
    %v1319 = vpack.c.b16 %v1015, %v1011
    %v1320 = vpack.c.b16 %v1016, %v1012
    %v1321 = vpack.c.b16 %v1017, %v1013
    %v1322 = vpack.c.b16 %v1018, %v1014
    %v1323 = vpack.c.b16 %v1023, %v1019
    %v1324 = vpack.c.b16 %v1024, %v1020
    %v1325 = vpack.c.b16 %v1025, %v1021
    %v1326 = vpack.c.b16 %v1026, %v1022
    %v1327 = vpack.c.b16 %v1031, %v1027
    %v1328 = vpack.c.b16 %v1032, %v1028
    %v1329 = vpack.c.b16 %v1033, %v1029
    %v1330 = vpack.c.b16 %v1034, %v1030
    %v1331 = vpack.c.b16 %v1039, %v1035
    %v1332 = vpack.c.b16 %v1040, %v1036
    %v1333 = vpack.c.b16 %v1041, %v1037
    %v1334 = vpack.c.b16 %v1042, %v1038
    %v1335 = vpack.c.b16 %v1047, %v1043
    %v1336 = vpack.c.b16 %v1048, %v1044
    %v1337 = vpack.c.b16 %v1049, %v1045
    %v1338 = vpack.c.b16 %v1050, %v1046
    %v1339 = vpack.c.b16 %v1055, %v1051
    %v1340 = vpack.c.b16 %v1056, %v1052
    %v1341 = vpack.c.b16 %v1057, %v1053
    %v1342 = vpack.c.b16 %v1058, %v1054
    %v1343 = vpack.c.b16 %v1063, %v1059
    %v1344 = vpack.c.b16 %v1064, %v1060
    %v1345 = vpack.c.b16 %v1065, %v1061
    %v1346 = vpack.c.b16 %v1066, %v1062
    %v1347 = vpack.c.b16 %v1071, %v1067
    %v1348 = vpack.c.b16 %v1072, %v1068
    %v1349 = vpack.c.b16 %v1073, %v1069
    %v1350 = vpack.c.b16 %v1074, %v1070
    %v1351 = vpack.c.b16 %v1079, %v1075
    %v1352 = vpack.c.b16 %v1080, %v1076
    %v1353 = vpack.c.b16 %v1081, %v1077
    %v1354 = vpack.c.b16 %v1082, %v1078
    %v1355 = vpack.c.b16 %v1087, %v1083
    %v1356 = vpack.c.b16 %v1088, %v1084
    %v1357 = vpack.c.b16 %v1089, %v1085
    %v1358 = vpack.c.b16 %v1090, %v1086
    %v1359 = vpack.c.b16 %v1095, %v1091
    %v1360 = vpack.c.b16 %v1096, %v1092
    %v1361 = vpack.c.b16 %v1097, %v1093
    %v1362 = vpack.c.b16 %v1098, %v1094
    %v1363 = vpack.c.b16 %v1103, %v1099
    %v1364 = vpack.c.b16 %v1104, %v1100
    %v1365 = vpack.c.b16 %v1105, %v1101
    %v1366 = vpack.c.b16 %v1106, %v1102
    %v1367 = vpack.c.b16 %v1111, %v1107
    %v1368 = vpack.c.b16 %v1112, %v1108
    %v1369 = vpack.c.b16 %v1113, %v1109
    %v1370 = vpack.c.b16 %v1114, %v1110
    %1627 = vmatpush.bf16.msra.mxu0 %v1143
    %1628 = vmatpush.bf16.msra.mxu0 %v1139
    %1629 = vmatpush.bf16.msra.mxu0 %v1135
    %1630 = vmatpush.bf16.msra.mxu0 %v1131
    %1631 = vmatpush.bf16.msra.mxu0 %v1127
    %1632 = vmatpush.bf16.msra.mxu0 %v1123
    %1633 = vmatpush.bf16.msra.mxu0 %v1119
    %1634 = vmatpush.bf16.msra.mxu0 %v1115
    %1635 = vmatmul.bf16.gmra.mxu0 %v79
    %v1636 = vpop.f32.mrf.mxu0
    %v1637 = vadd.f32 0.0, %v1636
    %v1638 = vpop.f32.mrf.mxu0
    %1639 = vdwg.mxu0
    %1640 = vmatpush.bf16.msra.mxu0 %v1175
    %1641 = vmatpush.bf16.msra.mxu0 %v1171
    %1642 = vmatpush.bf16.msra.mxu0 %v1167
    %1643 = vmatpush.bf16.msra.mxu0 %v1163
    %1644 = vmatpush.bf16.msra.mxu0 %v1159
    %1645 = vmatpush.bf16.msra.mxu0 %v1155
    %1646 = vmatpush.bf16.msra.mxu0 %v1151
    %1647 = vmatpush.bf16.msra.mxu0 %v1147
    %1648 = vmatmul.bf16.gmra.mxu0 %v80
    %v1649 = vpop.f32.mrf.mxu0
    %v1650 = vadd.f32 %v1637, %v1649
    %v1651 = vpop.f32.mrf.mxu0
    %1652 = vdwg.mxu0
    %1653 = vmatpush.bf16.msra.mxu0 %v1207
    %1654 = vmatpush.bf16.msra.mxu0 %v1203
    %1655 = vmatpush.bf16.msra.mxu0 %v1199
    %1656 = vmatpush.bf16.msra.mxu0 %v1195
    %1657 = vmatpush.bf16.msra.mxu0 %v1191
    %1658 = vmatpush.bf16.msra.mxu0 %v1187
    %1659 = vmatpush.bf16.msra.mxu0 %v1183
    %1660 = vmatpush.bf16.msra.mxu0 %v1179
    %1661 = vmatmul.bf16.gmra.mxu0 %v81
    %v1662 = vpop.f32.mrf.mxu0
    %v1663 = vadd.f32 %v1650, %v1662
    %v1664 = vpop.f32.mrf.mxu0
    %1665 = vdwg.mxu0
    %1666 = vmatpush.bf16.msra.mxu0 %v1239
    %1667 = vmatpush.bf16.msra.mxu0 %v1235
    %1668 = vmatpush.bf16.msra.mxu0 %v1231
    %1669 = vmatpush.bf16.msra.mxu0 %v1227
    %1670 = vmatpush.bf16.msra.mxu0 %v1223
    %1671 = vmatpush.bf16.msra.mxu0 %v1219
    %1672 = vmatpush.bf16.msra.mxu0 %v1215
    %1673 = vmatpush.bf16.msra.mxu0 %v1211
    %1674 = vmatmul.bf16.gmra.mxu0 %v82
    %v1675 = vpop.f32.mrf.mxu0
    %v1676 = vadd.f32 %v1663, %v1675
    %v1677 = vpop.f32.mrf.mxu0
    %1678 = vdwg.mxu0
    %1679 = vmatpush.bf16.msra.mxu0 %v1271
    %1680 = vmatpush.bf16.msra.mxu0 %v1267
    %1681 = vmatpush.bf16.msra.mxu0 %v1263
    %1682 = vmatpush.bf16.msra.mxu0 %v1259
    %1683 = vmatpush.bf16.msra.mxu0 %v1255
    %1684 = vmatpush.bf16.msra.mxu0 %v1251
    %1685 = vmatpush.bf16.msra.mxu0 %v1247
    %1686 = vmatpush.bf16.msra.mxu0 %v1243
    %1687 = vmatmul.bf16.gmra.mxu0 %v83
    %v1688 = vpop.f32.mrf.mxu0
    %v1689 = vadd.f32 %v1676, %v1688
    %v1690 = vpop.f32.mrf.mxu0
    %1691 = vdwg.mxu0
    %1692 = vmatpush.bf16.msra.mxu0 %v1303
    %1693 = vmatpush.bf16.msra.mxu0 %v1299
    %1694 = vmatpush.bf16.msra.mxu0 %v1295
    %1695 = vmatpush.bf16.msra.mxu0 %v1291
    %1696 = vmatpush.bf16.msra.mxu0 %v1287
    %1697 = vmatpush.bf16.msra.mxu0 %v1283
    %1698 = vmatpush.bf16.msra.mxu0 %v1279
    %1699 = vmatpush.bf16.msra.mxu0 %v1275
    %1700 = vmatmul.bf16.gmra.mxu0 %v84
    %v1701 = vpop.f32.mrf.mxu0
    %v1702 = vadd.f32 %v1689, %v1701
    %v1703 = vpop.f32.mrf.mxu0
    %1704 = vdwg.mxu0
    %1705 = vmatpush.bf16.msra.mxu0 %v1335
    %1706 = vmatpush.bf16.msra.mxu0 %v1331
    %1707 = vmatpush.bf16.msra.mxu0 %v1327
    %1708 = vmatpush.bf16.msra.mxu0 %v1323
    %1709 = vmatpush.bf16.msra.mxu0 %v1319
    %1710 = vmatpush.bf16.msra.mxu0 %v1315
    %1711 = vmatpush.bf16.msra.mxu0 %v1311
    %1712 = vmatpush.bf16.msra.mxu0 %v1307
    %1713 = vmatmul.bf16.gmra.mxu0 %v85
    %v1714 = vpop.f32.mrf.mxu0
    %v1715 = vadd.f32 %v1702, %v1714
    %v1716 = vpop.f32.mrf.mxu0
    %1717 = vdwg.mxu0
    %1718 = vmatpush.bf16.msra.mxu0 %v1367
    %1719 = vmatpush.bf16.msra.mxu0 %v1363
    %1720 = vmatpush.bf16.msra.mxu0 %v1359
    %1721 = vmatpush.bf16.msra.mxu0 %v1355
    %1722 = vmatpush.bf16.msra.mxu0 %v1351
    %1723 = vmatpush.bf16.msra.mxu0 %v1347
    %1724 = vmatpush.bf16.msra.mxu0 %v1343
    %1725 = vmatpush.bf16.msra.mxu0 %v1339
    %1726 = vmatmul.bf16.gmra.mxu0 %v86
    %v1727 = vpop.f32.mrf.mxu0
    %v1728 = vadd.f32 %v1715, %v1727
    %v1729 = vpop.f32.mrf.mxu0
    %1730 = vdwg.mxu0
    %1731 = vmatpush.bf16.msra.mxu0 %v1144
    %1732 = vmatpush.bf16.msra.mxu0 %v1140
    %1733 = vmatpush.bf16.msra.mxu0 %v1136
    %1734 = vmatpush.bf16.msra.mxu0 %v1132
    %1735 = vmatpush.bf16.msra.mxu0 %v1128
    %1736 = vmatpush.bf16.msra.mxu0 %v1124
    %1737 = vmatpush.bf16.msra.mxu0 %v1120
    %1738 = vmatpush.bf16.msra.mxu0 %v1116
    %1739 = vmatmul.bf16.gmra.mxu0 %v79
    %v1740 = vpop.f32.mrf.mxu0
    %v1741 = vadd.f32 0.0, %v1740
    %v1742 = vpop.f32.mrf.mxu0
    %1743 = vdwg.mxu0
    %1744 = vmatpush.bf16.msra.mxu0 %v1176
    %1745 = vmatpush.bf16.msra.mxu0 %v1172
    %1746 = vmatpush.bf16.msra.mxu0 %v1168
    %1747 = vmatpush.bf16.msra.mxu0 %v1164
    %1748 = vmatpush.bf16.msra.mxu0 %v1160
    %1749 = vmatpush.bf16.msra.mxu0 %v1156
    %1750 = vmatpush.bf16.msra.mxu0 %v1152
    %1751 = vmatpush.bf16.msra.mxu0 %v1148
    %1752 = vmatmul.bf16.gmra.mxu0 %v80
    %v1753 = vpop.f32.mrf.mxu0
    %v1754 = vadd.f32 %v1741, %v1753
    %v1755 = vpop.f32.mrf.mxu0
    %1756 = vdwg.mxu0
    %1757 = vmatpush.bf16.msra.mxu0 %v1208
    %1758 = vmatpush.bf16.msra.mxu0 %v1204
    %1759 = vmatpush.bf16.msra.mxu0 %v1200
    %1760 = vmatpush.bf16.msra.mxu0 %v1196
    %1761 = vmatpush.bf16.msra.mxu0 %v1192
    %1762 = vmatpush.bf16.msra.mxu0 %v1188
    %1763 = vmatpush.bf16.msra.mxu0 %v1184
    %1764 = vmatpush.bf16.msra.mxu0 %v1180
    %1765 = vmatmul.bf16.gmra.mxu0 %v81
    %v1766 = vpop.f32.mrf.mxu0
    %v1767 = vadd.f32 %v1754, %v1766
    %v1768 = vpop.f32.mrf.mxu0
    %1769 = vdwg.mxu0
    %1770 = vmatpush.bf16.msra.mxu0 %v1240
    %1771 = vmatpush.bf16.msra.mxu0 %v1236
    %1772 = vmatpush.bf16.msra.mxu0 %v1232
    %1773 = vmatpush.bf16.msra.mxu0 %v1228
    %1774 = vmatpush.bf16.msra.mxu0 %v1224
    %1775 = vmatpush.bf16.msra.mxu0 %v1220
    %1776 = vmatpush.bf16.msra.mxu0 %v1216
    %1777 = vmatpush.bf16.msra.mxu0 %v1212
    %1778 = vmatmul.bf16.gmra.mxu0 %v82
    %v1779 = vpop.f32.mrf.mxu0
    %v1780 = vadd.f32 %v1767, %v1779
    %v1781 = vpop.f32.mrf.mxu0
    %1782 = vdwg.mxu0
    %1783 = vmatpush.bf16.msra.mxu0 %v1272
    %1784 = vmatpush.bf16.msra.mxu0 %v1268
    %1785 = vmatpush.bf16.msra.mxu0 %v1264
    %1786 = vmatpush.bf16.msra.mxu0 %v1260
    %1787 = vmatpush.bf16.msra.mxu0 %v1256
    %1788 = vmatpush.bf16.msra.mxu0 %v1252
    %1789 = vmatpush.bf16.msra.mxu0 %v1248
    %1790 = vmatpush.bf16.msra.mxu0 %v1244
    %1791 = vmatmul.bf16.gmra.mxu0 %v83
    %v1792 = vpop.f32.mrf.mxu0
    %v1793 = vadd.f32 %v1780, %v1792
    %v1794 = vpop.f32.mrf.mxu0
    %1795 = vdwg.mxu0
    %1796 = vmatpush.bf16.msra.mxu0 %v1304
    %1797 = vmatpush.bf16.msra.mxu0 %v1300
    %1798 = vmatpush.bf16.msra.mxu0 %v1296
    %1799 = vmatpush.bf16.msra.mxu0 %v1292
    %1800 = vmatpush.bf16.msra.mxu0 %v1288
    %1801 = vmatpush.bf16.msra.mxu0 %v1284
    %1802 = vmatpush.bf16.msra.mxu0 %v1280
    %1803 = vmatpush.bf16.msra.mxu0 %v1276
    %1804 = vmatmul.bf16.gmra.mxu0 %v84
    %v1805 = vpop.f32.mrf.mxu0
    %v1806 = vadd.f32 %v1793, %v1805
    %v1807 = vpop.f32.mrf.mxu0
    %1808 = vdwg.mxu0
    %1809 = vmatpush.bf16.msra.mxu0 %v1336
    %1810 = vmatpush.bf16.msra.mxu0 %v1332
    %1811 = vmatpush.bf16.msra.mxu0 %v1328
    %1812 = vmatpush.bf16.msra.mxu0 %v1324
    %1813 = vmatpush.bf16.msra.mxu0 %v1320
    %1814 = vmatpush.bf16.msra.mxu0 %v1316
    %1815 = vmatpush.bf16.msra.mxu0 %v1312
    %1816 = vmatpush.bf16.msra.mxu0 %v1308
    %1817 = vmatmul.bf16.gmra.mxu0 %v85
    %v1818 = vpop.f32.mrf.mxu0
    %v1819 = vadd.f32 %v1806, %v1818
    %v1820 = vpop.f32.mrf.mxu0
    %1821 = vdwg.mxu0
    %1822 = vmatpush.bf16.msra.mxu0 %v1368
    %1823 = vmatpush.bf16.msra.mxu0 %v1364
    %1824 = vmatpush.bf16.msra.mxu0 %v1360
    %1825 = vmatpush.bf16.msra.mxu0 %v1356
    %1826 = vmatpush.bf16.msra.mxu0 %v1352
    %1827 = vmatpush.bf16.msra.mxu0 %v1348
    %1828 = vmatpush.bf16.msra.mxu0 %v1344
    %1829 = vmatpush.bf16.msra.mxu0 %v1340
    %1830 = vmatmul.bf16.gmra.mxu0 %v86
    %v1831 = vpop.f32.mrf.mxu0
    %v1832 = vadd.f32 %v1819, %v1831
    %v1833 = vpop.f32.mrf.mxu0
    %1834 = vdwg.mxu0
    %1835 = vmatpush.bf16.msra.mxu0 %v1145
    %1836 = vmatpush.bf16.msra.mxu0 %v1141
    %1837 = vmatpush.bf16.msra.mxu0 %v1137
    %1838 = vmatpush.bf16.msra.mxu0 %v1133
    %1839 = vmatpush.bf16.msra.mxu0 %v1129
    %1840 = vmatpush.bf16.msra.mxu0 %v1125
    %1841 = vmatpush.bf16.msra.mxu0 %v1121
    %1842 = vmatpush.bf16.msra.mxu0 %v1117
    %1843 = vmatmul.bf16.gmra.mxu0 %v79
    %v1844 = vpop.f32.mrf.mxu0
    %v1845 = vadd.f32 0.0, %v1844
    %v1846 = vpop.f32.mrf.mxu0
    %1847 = vdwg.mxu0
    %1848 = vmatpush.bf16.msra.mxu0 %v1177
    %1849 = vmatpush.bf16.msra.mxu0 %v1173
    %1850 = vmatpush.bf16.msra.mxu0 %v1169
    %1851 = vmatpush.bf16.msra.mxu0 %v1165
    %1852 = vmatpush.bf16.msra.mxu0 %v1161
    %1853 = vmatpush.bf16.msra.mxu0 %v1157
    %1854 = vmatpush.bf16.msra.mxu0 %v1153
    %1855 = vmatpush.bf16.msra.mxu0 %v1149
    %1856 = vmatmul.bf16.gmra.mxu0 %v80
    %v1857 = vpop.f32.mrf.mxu0
    %v1858 = vadd.f32 %v1845, %v1857
    %v1859 = vpop.f32.mrf.mxu0
    %1860 = vdwg.mxu0
    %1861 = vmatpush.bf16.msra.mxu0 %v1209
    %1862 = vmatpush.bf16.msra.mxu0 %v1205
    %1863 = vmatpush.bf16.msra.mxu0 %v1201
    %1864 = vmatpush.bf16.msra.mxu0 %v1197
    %1865 = vmatpush.bf16.msra.mxu0 %v1193
    %1866 = vmatpush.bf16.msra.mxu0 %v1189
    %1867 = vmatpush.bf16.msra.mxu0 %v1185
    %1868 = vmatpush.bf16.msra.mxu0 %v1181
    %1869 = vmatmul.bf16.gmra.mxu0 %v81
    %v1870 = vpop.f32.mrf.mxu0
    %v1871 = vadd.f32 %v1858, %v1870
    %v1872 = vpop.f32.mrf.mxu0
    %1873 = vdwg.mxu0
    %1874 = vmatpush.bf16.msra.mxu0 %v1241
    %1875 = vmatpush.bf16.msra.mxu0 %v1237
    %1876 = vmatpush.bf16.msra.mxu0 %v1233
    %1877 = vmatpush.bf16.msra.mxu0 %v1229
    %1878 = vmatpush.bf16.msra.mxu0 %v1225
    %1879 = vmatpush.bf16.msra.mxu0 %v1221
    %1880 = vmatpush.bf16.msra.mxu0 %v1217
    %1881 = vmatpush.bf16.msra.mxu0 %v1213
    %1882 = vmatmul.bf16.gmra.mxu0 %v82
    %v1883 = vpop.f32.mrf.mxu0
    %v1884 = vadd.f32 %v1871, %v1883
    %v1885 = vpop.f32.mrf.mxu0
    %1886 = vdwg.mxu0
    %1887 = vmatpush.bf16.msra.mxu0 %v1273
    %1888 = vmatpush.bf16.msra.mxu0 %v1269
    %1889 = vmatpush.bf16.msra.mxu0 %v1265
    %1890 = vmatpush.bf16.msra.mxu0 %v1261
    %1891 = vmatpush.bf16.msra.mxu0 %v1257
    %1892 = vmatpush.bf16.msra.mxu0 %v1253
    %1893 = vmatpush.bf16.msra.mxu0 %v1249
    %1894 = vmatpush.bf16.msra.mxu0 %v1245
    %1895 = vmatmul.bf16.gmra.mxu0 %v83
    %v1896 = vpop.f32.mrf.mxu0
    %v1897 = vadd.f32 %v1884, %v1896
    %v1898 = vpop.f32.mrf.mxu0
    %1899 = vdwg.mxu0
    %1900 = vmatpush.bf16.msra.mxu0 %v1305
    %1901 = vmatpush.bf16.msra.mxu0 %v1301
    %1902 = vmatpush.bf16.msra.mxu0 %v1297
    %1903 = vmatpush.bf16.msra.mxu0 %v1293
    %1904 = vmatpush.bf16.msra.mxu0 %v1289
    %1905 = vmatpush.bf16.msra.mxu0 %v1285
    %1906 = vmatpush.bf16.msra.mxu0 %v1281
    %1907 = vmatpush.bf16.msra.mxu0 %v1277
    %1908 = vmatmul.bf16.gmra.mxu0 %v84
    %v1909 = vpop.f32.mrf.mxu0
    %v1910 = vadd.f32 %v1897, %v1909
    %v1911 = vpop.f32.mrf.mxu0
    %1912 = vdwg.mxu0
    %1913 = vmatpush.bf16.msra.mxu0 %v1337
    %1914 = vmatpush.bf16.msra.mxu0 %v1333
    %1915 = vmatpush.bf16.msra.mxu0 %v1329
    %1916 = vmatpush.bf16.msra.mxu0 %v1325
    %1917 = vmatpush.bf16.msra.mxu0 %v1321
    %1918 = vmatpush.bf16.msra.mxu0 %v1317
    %1919 = vmatpush.bf16.msra.mxu0 %v1313
    %1920 = vmatpush.bf16.msra.mxu0 %v1309
    %1921 = vmatmul.bf16.gmra.mxu0 %v85
    %v1922 = vpop.f32.mrf.mxu0
    %v1923 = vadd.f32 %v1910, %v1922
    %v1924 = vpop.f32.mrf.mxu0
    %1925 = vdwg.mxu0
    %1926 = vmatpush.bf16.msra.mxu0 %v1369
    %1927 = vmatpush.bf16.msra.mxu0 %v1365
    %1928 = vmatpush.bf16.msra.mxu0 %v1361
    %1929 = vmatpush.bf16.msra.mxu0 %v1357
    %1930 = vmatpush.bf16.msra.mxu0 %v1353
    %1931 = vmatpush.bf16.msra.mxu0 %v1349
    %1932 = vmatpush.bf16.msra.mxu0 %v1345
    %1933 = vmatpush.bf16.msra.mxu0 %v1341
    %1934 = vmatmul.bf16.gmra.mxu0 %v86
    %v1935 = vpop.f32.mrf.mxu0
    %v1936 = vadd.f32 %v1923, %v1935
    %v1937 = vpop.f32.mrf.mxu0
    %1938 = vdwg.mxu0
    %1939 = vmatpush.bf16.msra.mxu0 %v1146
    %1940 = vmatpush.bf16.msra.mxu0 %v1142
    %1941 = vmatpush.bf16.msra.mxu0 %v1138
    %1942 = vmatpush.bf16.msra.mxu0 %v1134
    %1943 = vmatpush.bf16.msra.mxu0 %v1130
    %1944 = vmatpush.bf16.msra.mxu0 %v1126
    %1945 = vmatpush.bf16.msra.mxu0 %v1122
    %1946 = vmatpush.bf16.msra.mxu0 %v1118
    %1947 = vmatmul.bf16.gmra.mxu0 %v79
    %v1948 = vpop.f32.mrf.mxu0
    %v1949 = vadd.f32 0.0, %v1948
    %v1950 = vpop.f32.mrf.mxu0
    %1951 = vdwg.mxu0
    %1952 = vmatpush.bf16.msra.mxu0 %v1178
    %1953 = vmatpush.bf16.msra.mxu0 %v1174
    %1954 = vmatpush.bf16.msra.mxu0 %v1170
    %1955 = vmatpush.bf16.msra.mxu0 %v1166
    %1956 = vmatpush.bf16.msra.mxu0 %v1162
    %1957 = vmatpush.bf16.msra.mxu0 %v1158
    %1958 = vmatpush.bf16.msra.mxu0 %v1154
    %1959 = vmatpush.bf16.msra.mxu0 %v1150
    %1960 = vmatmul.bf16.gmra.mxu0 %v80
    %v1961 = vpop.f32.mrf.mxu0
    %v1962 = vadd.f32 %v1949, %v1961
    %v1963 = vpop.f32.mrf.mxu0
    %1964 = vdwg.mxu0
    %1965 = vmatpush.bf16.msra.mxu0 %v1210
    %1966 = vmatpush.bf16.msra.mxu0 %v1206
    %1967 = vmatpush.bf16.msra.mxu0 %v1202
    %1968 = vmatpush.bf16.msra.mxu0 %v1198
    %1969 = vmatpush.bf16.msra.mxu0 %v1194
    %1970 = vmatpush.bf16.msra.mxu0 %v1190
    %1971 = vmatpush.bf16.msra.mxu0 %v1186
    %1972 = vmatpush.bf16.msra.mxu0 %v1182
    %1973 = vmatmul.bf16.gmra.mxu0 %v81
    %v1974 = vpop.f32.mrf.mxu0
    %v1975 = vadd.f32 %v1962, %v1974
    %v1976 = vpop.f32.mrf.mxu0
    %1977 = vdwg.mxu0
    %1978 = vmatpush.bf16.msra.mxu0 %v1242
    %1979 = vmatpush.bf16.msra.mxu0 %v1238
    %1980 = vmatpush.bf16.msra.mxu0 %v1234
    %1981 = vmatpush.bf16.msra.mxu0 %v1230
    %1982 = vmatpush.bf16.msra.mxu0 %v1226
    %1983 = vmatpush.bf16.msra.mxu0 %v1222
    %1984 = vmatpush.bf16.msra.mxu0 %v1218
    %1985 = vmatpush.bf16.msra.mxu0 %v1214
    %1986 = vmatmul.bf16.gmra.mxu0 %v82
    %v1987 = vpop.f32.mrf.mxu0
    %v1988 = vadd.f32 %v1975, %v1987
    %v1989 = vpop.f32.mrf.mxu0
    %1990 = vdwg.mxu0
    %1991 = vmatpush.bf16.msra.mxu0 %v1274
    %1992 = vmatpush.bf16.msra.mxu0 %v1270
    %1993 = vmatpush.bf16.msra.mxu0 %v1266
    %1994 = vmatpush.bf16.msra.mxu0 %v1262
    %1995 = vmatpush.bf16.msra.mxu0 %v1258
    %1996 = vmatpush.bf16.msra.mxu0 %v1254
    %1997 = vmatpush.bf16.msra.mxu0 %v1250
    %1998 = vmatpush.bf16.msra.mxu0 %v1246
    %1999 = vmatmul.bf16.gmra.mxu0 %v83
    %v2000 = vpop.f32.mrf.mxu0
    %v2001 = vadd.f32 %v1988, %v2000
    %v2002 = vpop.f32.mrf.mxu0
    %2003 = vdwg.mxu0
    %2004 = vmatpush.bf16.msra.mxu0 %v1306
    %2005 = vmatpush.bf16.msra.mxu0 %v1302
    %2006 = vmatpush.bf16.msra.mxu0 %v1298
    %2007 = vmatpush.bf16.msra.mxu0 %v1294
    %2008 = vmatpush.bf16.msra.mxu0 %v1290
    %2009 = vmatpush.bf16.msra.mxu0 %v1286
    %2010 = vmatpush.bf16.msra.mxu0 %v1282
    %2011 = vmatpush.bf16.msra.mxu0 %v1278
    %2012 = vmatmul.bf16.gmra.mxu0 %v84
    %v2013 = vpop.f32.mrf.mxu0
    %v2014 = vadd.f32 %v2001, %v2013
    %v2015 = vpop.f32.mrf.mxu0
    %2016 = vdwg.mxu0
    %2017 = vmatpush.bf16.msra.mxu0 %v1338
    %2018 = vmatpush.bf16.msra.mxu0 %v1334
    %2019 = vmatpush.bf16.msra.mxu0 %v1330
    %2020 = vmatpush.bf16.msra.mxu0 %v1326
    %2021 = vmatpush.bf16.msra.mxu0 %v1322
    %2022 = vmatpush.bf16.msra.mxu0 %v1318
    %2023 = vmatpush.bf16.msra.mxu0 %v1314
    %2024 = vmatpush.bf16.msra.mxu0 %v1310
    %2025 = vmatmul.bf16.gmra.mxu0 %v85
    %v2026 = vpop.f32.mrf.mxu0
    %v2027 = vadd.f32 %v2014, %v2026
    %v2028 = vpop.f32.mrf.mxu0
    %2029 = vdwg.mxu0
    %2030 = vmatpush.bf16.msra.mxu0 %v1370
    %2031 = vmatpush.bf16.msra.mxu0 %v1366
    %2032 = vmatpush.bf16.msra.mxu0 %v1362
    %2033 = vmatpush.bf16.msra.mxu0 %v1358
    %2034 = vmatpush.bf16.msra.mxu0 %v1354
    %2035 = vmatpush.bf16.msra.mxu0 %v1350
    %2036 = vmatpush.bf16.msra.mxu0 %v1346
    %2037 = vmatpush.bf16.msra.mxu0 %v1342
    %2038 = vmatmul.bf16.gmra.mxu0 %v86
    %v2039 = vpop.f32.mrf.mxu0
    %v2040 = vadd.f32 %v2027, %v2039
    %v2041 = vpop.f32.mrf.mxu0
    %2042 = vdwg.mxu0
    %v2043 = vadd.f32 %v87, %v1728
    %v2044 = vadd.f32 %v88, %v1832
    %v2045 = vadd.f32 %v89, %v1936
    %v2046 = vadd.f32 %v90, %v2040
    %2047 = vst [vmem:[#allocation2] sm:$0xff] %v2043
    %2048 = vst [vmem:[#allocation2 + $0x8] sm:$0xff] %v2044
    %2049 = vst [vmem:[#allocation2 + $0x10] sm:$0xff] %v2045
    %2050 = vst [vmem:[#allocation2 + $0x18] sm:$0xff] %v2046
    // Predicated region
    $region34: #{tpu_custom_call.1} parent=1 // pred_check
      %p2051 = pneg %p63
    $region35: #{tpu_custom_call.1} parent=1 // pred_check_branch
      %2053 = sbr.rel (%p2051) target = $region37
    $region36: #{tpu_custom_call.1} parent=1 // pred_region
      %v2054 = vld [vmem:[#allocation2] sm:$0xff]
      %v2055 = vld [vmem:[#allocation2 + $0x8] sm:$0xff]
      %v2056 = vld [vmem:[#allocation2 + $0x10] sm:$0xff]
      %v2057 = vld [vmem:[#allocation2 + $0x18] sm:$0xff]
      %v2058 = vld [vmem:[#allocation8] sm:$0xff]
      %v2059 = vld [vmem:[#allocation8 + $0x8] sm:$0xff]
      %v2060 = vld [vmem:[#allocation8 + $0x10] sm:$0xff]
      %v2061 = vld [vmem:[#allocation8 + $0x18] sm:$0xff]
      %v2062 = vld [vmem:[#allocation8 + $0x20] sm:$0xff]
      %v2063 = vld [vmem:[#allocation8 + $0x28] sm:$0xff]
      %v2064 = vld [vmem:[#allocation8 + $0x30] sm:$0xff]
      %v2065 = vld [vmem:[#allocation8 + $0x38] sm:$0xff]
      %v2066 = vld [vmem:[#allocation8 + $0x40] sm:$0xff]
      %v2067 = vld [vmem:[#allocation8 + $0x48] sm:$0xff]
      %v2068 = vld [vmem:[#allocation8 + $0x50] sm:$0xff]
      %v2069 = vld [vmem:[#allocation8 + $0x58] sm:$0xff]
      %v2070 = vld [vmem:[#allocation8 + $0x60] sm:$0xff]
      %v2071 = vld [vmem:[#allocation8 + $0x68] sm:$0xff]
      %v2072 = vld [vmem:[#allocation8 + $0x70] sm:$0xff]
      %v2073 = vld [vmem:[#allocation8 + $0x78] sm:$0xff]
      %v2074 = vld [vmem:[#allocation8 + $0x80] sm:$0xff]
      %v2075 = vld [vmem:[#allocation8 + $0x88] sm:$0xff]
      %v2076 = vld [vmem:[#allocation8 + $0x90] sm:$0xff]
      %v2077 = vld [vmem:[#allocation8 + $0x98] sm:$0xff]
      %v2078 = vld [vmem:[#allocation8 + $0xa0] sm:$0xff]
      %v2079 = vld [vmem:[#allocation8 + $0xa8] sm:$0xff]
      %v2080 = vld [vmem:[#allocation8 + $0xb0] sm:$0xff]
      %v2081 = vld [vmem:[#allocation8 + $0xb8] sm:$0xff]
      %v2082 = vld [vmem:[#allocation8 + $0xc0] sm:$0xff]
      %v2083 = vld [vmem:[#allocation8 + $0xc8] sm:$0xff]
      %v2084 = vld [vmem:[#allocation8 + $0xd0] sm:$0xff]
      %v2085 = vld [vmem:[#allocation8 + $0xd8] sm:$0xff]
      %v2086 = vld [vmem:[#allocation8 + $0xe0] sm:$0xff]
      %v2087 = vld [vmem:[#allocation8 + $0xe8] sm:$0xff]
      %v2088 = vld [vmem:[#allocation8 + $0xf0] sm:$0xff]
      %v2089 = vld [vmem:[#allocation8 + $0xf8] sm:$0xff]
      %v2090 = vld [vmem:[#allocation8 + $0x100] sm:$0xff]
      %v2091 = vld [vmem:[#allocation8 + $0x108] sm:$0xff]
      %v2092 = vld [vmem:[#allocation8 + $0x110] sm:$0xff]
      %v2093 = vld [vmem:[#allocation8 + $0x118] sm:$0xff]
      %v2094 = vld [vmem:[#allocation8 + $0x120] sm:$0xff]
      %v2095 = vld [vmem:[#allocation8 + $0x128] sm:$0xff]
      %v2096 = vld [vmem:[#allocation8 + $0x130] sm:$0xff]
      %v2097 = vld [vmem:[#allocation8 + $0x138] sm:$0xff]
      %v2098 = vld [vmem:[#allocation8 + $0x140] sm:$0xff]
      %v2099 = vld [vmem:[#allocation8 + $0x148] sm:$0xff]
      %v2100 = vld [vmem:[#allocation8 + $0x150] sm:$0xff]
      %v2101 = vld [vmem:[#allocation8 + $0x158] sm:$0xff]
      %v2102 = vld [vmem:[#allocation8 + $0x160] sm:$0xff]
      %v2103 = vld [vmem:[#allocation8 + $0x168] sm:$0xff]
      %v2104 = vld [vmem:[#allocation8 + $0x170] sm:$0xff]
      %v2105 = vld [vmem:[#allocation8 + $0x178] sm:$0xff]
      %v2106 = vld [vmem:[#allocation8 + $0x180] sm:$0xff]
      %v2107 = vld [vmem:[#allocation8 + $0x188] sm:$0xff]
      %v2108 = vld [vmem:[#allocation8 + $0x190] sm:$0xff]
      %v2109 = vld [vmem:[#allocation8 + $0x198] sm:$0xff]
      %v2110 = vld [vmem:[#allocation8 + $0x1a0] sm:$0xff]
      %v2111 = vld [vmem:[#allocation8 + $0x1a8] sm:$0xff]
      %v2112 = vld [vmem:[#allocation8 + $0x1b0] sm:$0xff]
      %v2113 = vld [vmem:[#allocation8 + $0x1b8] sm:$0xff]
      %v2114 = vld [vmem:[#allocation8 + $0x1c0] sm:$0xff]
      %v2115 = vld [vmem:[#allocation8 + $0x1c8] sm:$0xff]
      %v2116 = vld [vmem:[#allocation8 + $0x1d0] sm:$0xff]
      %v2117 = vld [vmem:[#allocation8 + $0x1d8] sm:$0xff]
      %v2118 = vld [vmem:[#allocation8 + $0x1e0] sm:$0xff]
      %v2119 = vld [vmem:[#allocation8 + $0x1e8] sm:$0xff]
      %v2120 = vld [vmem:[#allocation8 + $0x1f0] sm:$0xff]
      %v2121 = vld [vmem:[#allocation8 + $0x1f8] sm:$0xff]
      %v2122 = vld [vmem:[%s3] sm:$0x1]
      %v2124 = vperm.slane %v2122, 0
      %2126 = vmatpush.msra.mxu0 %v2073
      %2127 = vmatpush.msra.mxu0 %v2072
      %2128 = vmatpush.msra.mxu0 %v2071
      %2129 = vmatpush.msra.mxu0 %v2070
      %2130 = vmatpush.msra.mxu0 %v2069
      %2131 = vmatpush.msra.mxu0 %v2068
      %2132 = vmatpush.msra.mxu0 %v2067
      %2133 = vmatpush.msra.mxu0 %v2066
      %2134 = vmatpush.msra.mxu0 %v2065
      %2135 = vmatpush.msra.mxu0 %v2064
      %2136 = vmatpush.msra.mxu0 %v2063
      %2137 = vmatpush.msra.mxu0 %v2062
      %2138 = vmatpush.msra.mxu0 %v2061
      %2139 = vmatpush.msra.mxu0 %v2060
      %2140 = vmatpush.msra.mxu0 %v2059
      %2141 = vmatpush.msra.mxu0 %v2058
      %2142 = vmatmul.f32.gmra.mxu0 %v2054
      %v2143 = vpop.f32.mrf.mxu0
      %v2144 = vadd.f32 %v2124, %v2143
      %2145 = vdwg.mxu0
      %2146 = vmatpush.msra.mxu0 %v2089
      %2147 = vmatpush.msra.mxu0 %v2088
      %2148 = vmatpush.msra.mxu0 %v2087
      %2149 = vmatpush.msra.mxu0 %v2086
      %2150 = vmatpush.msra.mxu0 %v2085
      %2151 = vmatpush.msra.mxu0 %v2084
      %2152 = vmatpush.msra.mxu0 %v2083
      %2153 = vmatpush.msra.mxu0 %v2082
      %2154 = vmatpush.msra.mxu0 %v2081
      %2155 = vmatpush.msra.mxu0 %v2080
      %2156 = vmatpush.msra.mxu0 %v2079
      %2157 = vmatpush.msra.mxu0 %v2078
      %2158 = vmatpush.msra.mxu0 %v2077
      %2159 = vmatpush.msra.mxu0 %v2076
      %2160 = vmatpush.msra.mxu0 %v2075
      %2161 = vmatpush.msra.mxu0 %v2074
      %2162 = vmatmul.f32.gmra.mxu0 %v2055
      %v2163 = vpop.f32.mrf.mxu0
      %v2164 = vadd.f32 %v2144, %v2163
      %2165 = vdwg.mxu0
      %2166 = vmatpush.msra.mxu0 %v2105
      %2167 = vmatpush.msra.mxu0 %v2104
      %2168 = vmatpush.msra.mxu0 %v2103
      %2169 = vmatpush.msra.mxu0 %v2102
      %2170 = vmatpush.msra.mxu0 %v2101
      %2171 = vmatpush.msra.mxu0 %v2100
      %2172 = vmatpush.msra.mxu0 %v2099
      %2173 = vmatpush.msra.mxu0 %v2098
      %2174 = vmatpush.msra.mxu0 %v2097
      %2175 = vmatpush.msra.mxu0 %v2096
      %2176 = vmatpush.msra.mxu0 %v2095
      %2177 = vmatpush.msra.mxu0 %v2094
      %2178 = vmatpush.msra.mxu0 %v2093
      %2179 = vmatpush.msra.mxu0 %v2092
      %2180 = vmatpush.msra.mxu0 %v2091
      %2181 = vmatpush.msra.mxu0 %v2090
      %2182 = vmatmul.f32.gmra.mxu0 %v2056
      %v2183 = vpop.f32.mrf.mxu0
      %v2184 = vadd.f32 %v2164, %v2183
      %2185 = vdwg.mxu0
      %2186 = vmatpush.msra.mxu0 %v2121
      %2187 = vmatpush.msra.mxu0 %v2120
      %2188 = vmatpush.msra.mxu0 %v2119
      %2189 = vmatpush.msra.mxu0 %v2118
      %2190 = vmatpush.msra.mxu0 %v2117
      %2191 = vmatpush.msra.mxu0 %v2116
      %2192 = vmatpush.msra.mxu0 %v2115
      %2193 = vmatpush.msra.mxu0 %v2114
      %2194 = vmatpush.msra.mxu0 %v2113
      %2195 = vmatpush.msra.mxu0 %v2112
      %2196 = vmatpush.msra.mxu0 %v2111
      %2197 = vmatpush.msra.mxu0 %v2110
      %2198 = vmatpush.msra.mxu0 %v2109
      %2199 = vmatpush.msra.mxu0 %v2108
      %2200 = vmatpush.msra.mxu0 %v2107
      %2201 = vmatpush.msra.mxu0 %v2106
      %2202 = vmatmul.f32.gmra.mxu0 %v2057
      %v2203 = vpop.f32.mrf.mxu0
      %v2204 = vadd.f32 %v2184, %v2203
      %2205 = vdwg.mxu0
      %2206 = vst [vmem:[#allocation9] sm:$0xff] %v2204
    $region37: #{tpu_custom_call.1} parent=1 // pred_fallthru
      _
    // Predicated region
    $region38: #{tpu_custom_call.1} parent=1 // pred_check
      _
    $region39: #{tpu_custom_call.1} parent=1 // pred_check_branch
      %2208 = sbr.rel (0) target = $region41
    $region40: #{tpu_custom_call.1} parent=1 // pred_region
      %2210 = vsyncadd [#allocation5], 0
      %s2212 = sshll.u32 [#allocation9], 4
      %s2213 = int_to_ptr.vmem [resolvable:$true] %s2212
      %s2214 = sshll.u32 %s4, 4
      %s2215 = int_to_ptr.hbm [resolvable:$true] %s2214
      %2217 = dma.vmem_to_hbm [thread:$0]  %s2213, 128, %s2215, [#allocation5]
    $region41: #{tpu_custom_call.1} parent=1 // pred_fallthru
      _
    // Predicated region
    $region42: #{tpu_custom_call.1} parent=1 // pred_check
      _
    $region43: #{tpu_custom_call.1} parent=1 // pred_check_branch
      %2219 = sbr.rel (0) target = $region45
    $region44: #{tpu_custom_call.1} parent=1 // pred_region
      %2221 = dma.done [#allocation5], 128
    $region45: #{tpu_custom_call.1} parent=1 // pred_fallthru
      _
    %2222 = vsyncpa [#allocation4], 1
    %2223 = vsyncpa [#allocation7], 1
    %2224 = vsyncpa [#allocation5], 1

</llo_original>
